<compile_context>
chip_gen: v5e
topology: v5e:2x2
jax: 0.10.0
libtpu: 0.0.40
codegen_flags: <defaults>
</compile_context>

<pallas_src>
import jax
import jax.numpy as jnp
from jax.experimental import pallas as pl
from jax.experimental.pallas import tpu as pltpu


def rrn_layer_kernel(src_col_ref, dst_col_ref, dst_row_ref, h0_ref,
                     wm_src_ref, wm_dst_ref, bm_ref,
                     wn_h_ref, wn_m_ref, bn_ref,
                     e_ref, h_out_ref, h_state):
    t = pl.program_id(1)
    n_steps = pl.num_programs(1)
    E = src_col_ref.shape[0]
    N, D = h_state.shape

    # First step of each graph: load incoming node state into the resident VMEM scratch.
    @pl.when(t == 0)
    def _():
        h_state[...] = h0_ref[0].astype(jnp.float32)

    h = h_state[...]                                                          # (N, D)

    # --- apply_edges(get_msg), reassociated: project through weight halves first ---
    hs = jnp.dot(h, wm_src_ref[...], preferred_element_type=jnp.float32)      # (N, D)
    hd = jnp.dot(h, wm_dst_ref[...], preferred_element_type=jnp.float32)      # (N, D)

    # One-hot gather operands built in-registers from int32 ids (no O(E*N) HBM traffic).
    node_iota = jax.lax.broadcasted_iota(jnp.int32, (E, N), 1)
    gsrc = jnp.where(node_iota == src_col_ref[...], 1.0, 0.0)                 # (E, N)
    e = jnp.dot(gsrc, hs, preferred_element_type=jnp.float32)
    gdst = jnp.where(node_iota == dst_col_ref[...], 1.0, 0.0)                 # (E, N)
    e = e + jnp.dot(gdst, hd, preferred_element_type=jnp.float32)
    e = jnp.maximum(e + bm_ref[...], 0.0)                                     # (E, D)

    # --- edge_dropout: eval-mode identity ---
    # TODO(synk): training-mode dropout would use pltpu.prng_seed / pltpu.prng_random_bits.

    # --- update_all(copy_e, sum): scatter-sum to destination nodes (one-hot^T matmul) ---
    scat_iota = jax.lax.broadcasted_iota(jnp.int32, (N, E), 0)
    scat = jnp.where(scat_iota == dst_row_ref[...], 1.0, 0.0)                 # (N, E)
    m = jnp.dot(scat, e, preferred_element_type=jnp.float32)                  # (N, D)

    # --- apply_nodes(node_update): node_update_func(cat([h, m], -1)) ---
    hn = jnp.dot(h, wn_h_ref[...], preferred_element_type=jnp.float32)
    hn = hn + jnp.dot(m, wn_m_ref[...], preferred_element_type=jnp.float32)
    hn = jnp.maximum(hn + bn_ref[...], 0.0)                                   # (N, D)

    h_state[...] = hn                                      # stays VMEM-resident across steps

    # Only the final step's edge messages / node states survive (matches repeated forward()).
    @pl.when(t == n_steps - 1)
    def _():
        e_ref[0] = e.astype(e_ref.dtype)
        h_out_ref[0] = hn.astype(h_out_ref.dtype)


def rrn_layer(h, src_ids, dst_ids, params, num_steps=1):
    """Apply the RRN layer `num_steps` times. h: (B, N, D) or (N, D). Returns (e, h_new)."""
    squeeze = (h.ndim == 2)
    if squeeze:
        h = h[None]
    B, N, D = h.shape
    E = src_ids.shape[0]
    wm_src, wm_dst, bm, wn_h, wn_m, bn = params

    src_col = src_ids.astype(jnp.int32).reshape(E, 1)
    dst_col = dst_ids.astype(jnp.int32).reshape(E, 1)
    dst_row = dst_ids.astype(jnp.int32).reshape(1, E)

    def const(shape):      # resident across the whole grid (never re-fetched)
        return pl.BlockSpec(shape, lambda b, t, _n=len(shape): (0,) * _n)

    def per_graph(shape):  # one block per graph, constant across the step axis
        return pl.BlockSpec(shape, lambda b, t, _n=len(shape): (b,) + (0,) * (_n - 1))

    e, h_new = pl.pallas_call(
        rrn_layer_kernel,
        out_shape=(jax.ShapeDtypeStruct((B, E, D), h.dtype),
                   jax.ShapeDtypeStruct((B, N, D), h.dtype)),
        grid=(B, num_steps),
        in_specs=[const((E, 1)), const((E, 1)), const((1, E)),
                  per_graph((1, N, D)),
                  const((D, D)), const((D, D)), const((1, D)),
                  const((D, D)), const((D, D)), const((1, D))],
        out_specs=(per_graph((1, E, D)), per_graph((1, N, D))),
        scratch_shapes=[pltpu.VMEM((N, D), jnp.float32)],
        compiler_params=pltpu.CompilerParams(
            dimension_semantics=("parallel", "arbitrary"),
            vmem_limit_bytes=32 * 1024 * 1024),
    )(src_col, dst_col, dst_row, h, wm_src, wm_dst, bm, wn_h, wn_m, bn)

    if squeeze:
        e, h_new = e[0], h_new[0]
    return e, h_new


def rrn_reference_step(h, src_ids, dst_ids, params):
    """Pure-JAX single-step reference with the exact DGL semantics."""
    wm_src, wm_dst, bm, wn_h, wn_m, bn = params
    cat_e = jnp.concatenate([h[src_ids], h[dst_ids]], -1)            # cat([src.h, dst.h], -1)
    wm = jnp.concatenate([wm_src, wm_dst], 0)
    e = jax.nn.relu(cat_e @ wm + bm[0])                              # msg_layer
    m = jax.ops.segment_sum(e, dst_ids, num_segments=h.shape[0])     # copy_e + sum
    wn = jnp.concatenate([wn_h, wn_m], 0)
    h_new = jax.nn.relu(jnp.concatenate([h, m], -1) @ wn + bn[0])    # node_update_func
    return e, h_new


def rrn_reference(h, src_ids, dst_ids, params, num_steps=1):
    def one_graph(hg):
        e = None
        for _ in range(num_steps):
            e, hg = rrn_reference_step(hg, src_ids, dst_ids, params)
        return e, hg
    return jax.vmap(one_graph)(h)


if __name__ == "__main__":
    B, N, D, E = 2, 64, 32, 256   # graphs, nodes, hidden dim, edges (small synthetic graphs)

    key = jax.random.PRNGKey(0)
    k_h, k_src, k_dst, k1, k2, k3, k4 = jax.random.split(key, 7)

    h = jax.random.normal(k_h, (B, N, D), dtype=jnp.float32)
    src_ids = jax.random.randint(k_src, (E,), 0, N, dtype=jnp.int32)
    dst_ids = jax.random.randint(k_dst, (E,), 0, N, dtype=jnp.int32)

    # msg_layer = Linear(2D, D)+ReLU split into src/dst halves; node_update = Linear(2D, D)+ReLU.
    wm_src = 0.1 * jax.random.normal(k1, (D, D), dtype=jnp.float32)
    wm_dst = 0.1 * jax.random.normal(k2, (D, D), dtype=jnp.float32)
    bm = jnp.zeros((1, D), dtype=jnp.float32)
    wn_h = 0.1 * jax.random.normal(k3, (D, D), dtype=jnp.float32)
    wn_m = 0.1 * jax.random.normal(k4, (D, D), dtype=jnp.float32)
    bn = jnp.zeros((1, D), dtype=jnp.float32)
    params = (wm_src, wm_dst, bm, wn_h, wn_m, bn)

    # Single application == exact RRNLayer.forward semantics.
    e1, h1 = rrn_layer(h, src_ids, dst_ids, params, num_steps=1)
    jax.block_until_ready((e1, h1))
    e1_r, h1_r = rrn_reference(h, src_ids, dst_ids, params, num_steps=1)
    assert jnp.allclose(e1, e1_r, atol=1e-4, rtol=1e-4)
    assert jnp.allclose(h1, h1_r, atol=1e-4, rtol=1e-4)

    # Fused multi-step message passing (h stays resident in VMEM across the step axis).
    T = 4
    eT, hT = rrn_layer(h, src_ids, dst_ids, params, num_steps=T)
    jax.block_until_ready((eT, hT))
    eT_r, hT_r = rrn_reference(h, src_ids, dst_ids, params, num_steps=T)
    assert jnp.allclose(eT, eT_r, atol=1e-3, rtol=1e-3)
    assert jnp.allclose(hT, hT_r, atol=1e-3, rtol=1e-3)

    print("KERNEL_OK")
</pallas_src>

<mosaic_0001>
module attributes {stable_mosaic.version = 11 : i64} {
  func.func @rrn_layer_kernel(%arg0: i32, %arg1: i32, %arg2: memref<256x1xi32, #tpu.memory_space<vmem>>, %arg3: memref<256x1xi32, #tpu.memory_space<vmem>>, %arg4: memref<1x256xi32, #tpu.memory_space<vmem>>, %arg5: memref<1x64x32xf32, #tpu.memory_space<vmem>>, %arg6: memref<32x32xf32, #tpu.memory_space<vmem>>, %arg7: memref<32x32xf32, #tpu.memory_space<vmem>>, %arg8: memref<1x32xf32, #tpu.memory_space<vmem>>, %arg9: memref<32x32xf32, #tpu.memory_space<vmem>>, %arg10: memref<32x32xf32, #tpu.memory_space<vmem>>, %arg11: memref<1x32xf32, #tpu.memory_space<vmem>>, %arg12: memref<1x256x32xf32, #tpu.memory_space<vmem>>, %arg13: memref<1x64x32xf32, #tpu.memory_space<vmem>>, %arg14: memref<64x32xf32, #tpu.memory_space<vmem>>) attributes {dimension_semantics = [#tpu.dimension_semantics<parallel>, #tpu.dimension_semantics<arbitrary>], iteration_bounds = array<i64: 2, 1>, scalar_prefetch = 0 : i64, scratch_operands = 1 : i64, tpu.core_type = #tpu.core_type<tc>, window_params = [{pipeline_mode = #tpu.pipeline_mode<synchronous>, transform_indices = @transform_0, window_bounds = array<i64: 256, 1>}, {pipeline_mode = #tpu.pipeline_mode<synchronous>, transform_indices = @transform_1, window_bounds = array<i64: 256, 1>}, {pipeline_mode = #tpu.pipeline_mode<synchronous>, transform_indices = @transform_2, window_bounds = array<i64: 1, 256>}, {transform_indices = @transform_3, window_bounds = array<i64: 1, 64, 32>}, {pipeline_mode = #tpu.pipeline_mode<synchronous>, transform_indices = @transform_4, window_bounds = array<i64: 32, 32>}, {pipeline_mode = #tpu.pipeline_mode<synchronous>, transform_indices = @transform_5, window_bounds = array<i64: 32, 32>}, {pipeline_mode = #tpu.pipeline_mode<synchronous>, transform_indices = @transform_6, window_bounds = array<i64: 1, 32>}, {pipeline_mode = #tpu.pipeline_mode<synchronous>, transform_indices = @transform_7, window_bounds = array<i64: 32, 32>}, {pipeline_mode = #tpu.pipeline_mode<synchronous>, transform_indices = @transform_8, window_bounds = array<i64: 32, 32>}, {pipeline_mode = #tpu.pipeline_mode<synchronous>, transform_indices = @transform_9, window_bounds = array<i64: 1, 32>}, {transform_indices = @transform_10, window_bounds = array<i64: 1, 256, 32>}, {transform_indices = @transform_11, window_bounds = array<i64: 1, 64, 32>}]} {
    %c0_i32 = arith.constant 0 : i32
    %0 = arith.cmpi eq, %arg1, %c0_i32 : i32
    %1 = arith.extui %0 : i1 to i32
    %c0_i32_0 = arith.constant 0 : i32
    %2 = arith.cmpi ne, %1, %c0_i32_0 : i32
    scf.if %2 {
      %c0_38 = arith.constant 0 : index
      %c0_39 = arith.constant 0 : index
      %c0_40 = arith.constant 0 : index
      %51 = vector.load %arg5[%c0_38, %c0_39, %c0_40] : memref<1x64x32xf32, #tpu.memory_space<vmem>>, vector<1x64x32xf32>
      %52 = vector.shape_cast %51 : vector<1x64x32xf32> to vector<64x32xf32>
      %c0_41 = arith.constant 0 : index
      %c0_42 = arith.constant 0 : index
      %53 = vector.load %arg14[%c0_41, %c0_42] : memref<64x32xf32, #tpu.memory_space<vmem>>, vector<64x32xf32>
      tpu.vector_store %arg14[%c0_41, %c0_42], %52 {strides = array<i32>} : memref<64x32xf32, #tpu.memory_space<vmem>>, vector<64x32xf32>,
    } else {
    }
    %c0 = arith.constant 0 : index
    %c0_1 = arith.constant 0 : index
    %3 = vector.load %arg14[%c0, %c0_1] : memref<64x32xf32, #tpu.memory_space<vmem>>, vector<64x32xf32>
    %c0_2 = arith.constant 0 : index
    %c0_3 = arith.constant 0 : index
    %4 = vector.load %arg6[%c0_2, %c0_3] : memref<32x32xf32, #tpu.memory_space<vmem>>, vector<32x32xf32>
    %cst = arith.constant dense<0.000000e+00> : vector<64x32xf32>
    %5 = tpu.matmul %3, %4, %cst {dimension_numbers = #tpu.dot_dimension_numbers<[1], [0], [0], [1], [0, 0, 1, 1], [], []>} : vector<64x32xf32>, vector<32x32xf32>, vector<64x32xf32> -> vector<64x32xf32>
    %c0_4 = arith.constant 0 : index
    %c0_5 = arith.constant 0 : index
    %6 = vector.load %arg7[%c0_4, %c0_5] : memref<32x32xf32, #tpu.memory_space<vmem>>, vector<32x32xf32>
    %cst_6 = arith.constant dense<0.000000e+00> : vector<64x32xf32>
    %7 = tpu.matmul %3, %6, %cst_6 {dimension_numbers = #tpu.dot_dimension_numbers<[1], [0], [0], [1], [0, 0, 1, 1], [], []>} : vector<64x32xf32>, vector<32x32xf32>, vector<64x32xf32> -> vector<64x32xf32>
    %8 = tpu.iota {dimensions = array<i32: 1>} : vector<256x64xi32>
    %c0_7 = arith.constant 0 : index
    %c0_8 = arith.constant 0 : index
    %9 = vector.load %arg2[%c0_7, %c0_8] : memref<256x1xi32, #tpu.memory_space<vmem>>, vector<256x1xi32>
    %10 = vector.broadcast %9 : vector<256x1xi32> to vector<256x64xi32>
    %11 = arith.cmpi eq, %8, %10 : vector<256x64xi32>
    %cst_9 = arith.constant 1.000000e+00 : f32
    %cst_10 = arith.constant 0.000000e+00 : f32
    %12 = vector.broadcast %cst_9 : f32 to vector<256x64xf32>
    %13 = vector.broadcast %cst_10 : f32 to vector<256x64xf32>
    %14 = arith.select %11, %12, %13 : vector<256x64xi1>, vector<256x64xf32>
    %cst_11 = arith.constant dense<0.000000e+00> : vector<256x32xf32>
    %15 = tpu.matmul %14, %5, %cst_11 {dimension_numbers = #tpu.dot_dimension_numbers<[1], [0], [0], [1], [0, 0, 1, 1], [], []>} : vector<256x64xf32>, vector<64x32xf32>, vector<256x32xf32> -> vector<256x32xf32>
    %c0_12 = arith.constant 0 : index
    %c0_13 = arith.constant 0 : index
    %16 = vector.load %arg3[%c0_12, %c0_13] : memref<256x1xi32, #tpu.memory_space<vmem>>, vector<256x1xi32>
    %17 = vector.broadcast %16 : vector<256x1xi32> to vector<256x64xi32>
    %18 = arith.cmpi eq, %8, %17 : vector<256x64xi32>
    %cst_14 = arith.constant 1.000000e+00 : f32
    %cst_15 = arith.constant 0.000000e+00 : f32
    %19 = vector.broadcast %cst_14 : f32 to vector<256x64xf32>
    %20 = vector.broadcast %cst_15 : f32 to vector<256x64xf32>
    %21 = arith.select %18, %19, %20 : vector<256x64xi1>, vector<256x64xf32>
    %cst_16 = arith.constant dense<0.000000e+00> : vector<256x32xf32>
    %22 = tpu.matmul %21, %7, %cst_16 {dimension_numbers = #tpu.dot_dimension_numbers<[1], [0], [0], [1], [0, 0, 1, 1], [], []>} : vector<256x64xf32>, vector<64x32xf32>, vector<256x32xf32> -> vector<256x32xf32>
    %23 = arith.addf %15, %22 : vector<256x32xf32>
    %c0_17 = arith.constant 0 : index
    %c0_18 = arith.constant 0 : index
    %24 = vector.load %arg8[%c0_17, %c0_18] : memref<1x32xf32, #tpu.memory_space<vmem>>, vector<1x32xf32>
    %25 = vector.broadcast %24 : vector<1x32xf32> to vector<256x32xf32>
    %26 = arith.addf %23, %25 : vector<256x32xf32>
    %cst_19 = arith.constant 0.000000e+00 : f32
    %27 = vector.broadcast %cst_19 : f32 to vector<256x32xf32>
    %28 = arith.maximumf %26, %27 : vector<256x32xf32>
    %29 = tpu.iota {dimensions = array<i32: 0>} : vector<64x256xi32>
    %c0_20 = arith.constant 0 : index
    %c0_21 = arith.constant 0 : index
    %30 = vector.load %arg4[%c0_20, %c0_21] : memref<1x256xi32, #tpu.memory_space<vmem>>, vector<1x256xi32>
    %31 = vector.broadcast %30 : vector<1x256xi32> to vector<64x256xi32>
    %32 = arith.cmpi eq, %29, %31 : vector<64x256xi32>
    %cst_22 = arith.constant 1.000000e+00 : f32
    %cst_23 = arith.constant 0.000000e+00 : f32
    %33 = vector.broadcast %cst_22 : f32 to vector<64x256xf32>
    %34 = vector.broadcast %cst_23 : f32 to vector<64x256xf32>
    %35 = arith.select %32, %33, %34 : vector<64x256xi1>, vector<64x256xf32>
    %cst_24 = arith.constant dense<0.000000e+00> : vector<64x32xf32>
    %36 = tpu.matmul %35, %28, %cst_24 {dimension_numbers = #tpu.dot_dimension_numbers<[1], [0], [0], [1], [0, 0, 1, 1], [], []>} : vector<64x256xf32>, vector<256x32xf32>, vector<64x32xf32> -> vector<64x32xf32>
    %c0_25 = arith.constant 0 : index
    %c0_26 = arith.constant 0 : index
    %37 = vector.load %arg9[%c0_25, %c0_26] : memref<32x32xf32, #tpu.memory_space<vmem>>, vector<32x32xf32>
    %cst_27 = arith.constant dense<0.000000e+00> : vector<64x32xf32>
    %38 = tpu.matmul %3, %37, %cst_27 {dimension_numbers = #tpu.dot_dimension_numbers<[1], [0], [0], [1], [0, 0, 1, 1], [], []>} : vector<64x32xf32>, vector<32x32xf32>, vector<64x32xf32> -> vector<64x32xf32>
    %c0_28 = arith.constant 0 : index
    %c0_29 = arith.constant 0 : index
    %39 = vector.load %arg10[%c0_28, %c0_29] : memref<32x32xf32, #tpu.memory_space<vmem>>, vector<32x32xf32>
    %cst_30 = arith.constant dense<0.000000e+00> : vector<64x32xf32>
    %40 = tpu.matmul %36, %39, %cst_30 {dimension_numbers = #tpu.dot_dimension_numbers<[1], [0], [0], [1], [0, 0, 1, 1], [], []>} : vector<64x32xf32>, vector<32x32xf32>, vector<64x32xf32> -> vector<64x32xf32>
    %41 = arith.addf %38, %40 : vector<64x32xf32>
    %c0_31 = arith.constant 0 : index
    %c0_32 = arith.constant 0 : index
    %42 = vector.load %arg11[%c0_31, %c0_32] : memref<1x32xf32, #tpu.memory_space<vmem>>, vector<1x32xf32>
    %43 = vector.broadcast %42 : vector<1x32xf32> to vector<64x32xf32>
    %44 = arith.addf %41, %43 : vector<64x32xf32>
    %cst_33 = arith.constant 0.000000e+00 : f32
    %45 = vector.broadcast %cst_33 : f32 to vector<64x32xf32>
    %46 = arith.maximumf %44, %45 : vector<64x32xf32>
    %c0_34 = arith.constant 0 : index
    %c0_35 = arith.constant 0 : index
    %47 = vector.load %arg14[%c0_34, %c0_35] : memref<64x32xf32, #tpu.memory_space<vmem>>, vector<64x32xf32>
    tpu.vector_store %arg14[%c0_34, %c0_35], %46 {strides = array<i32>} : memref<64x32xf32, #tpu.memory_space<vmem>>, vector<64x32xf32>,
    %c0_i32_36 = arith.constant 0 : i32
    %48 = arith.cmpi eq, %arg1, %c0_i32_36 : i32
    %49 = arith.extui %48 : i1 to i32
    %c0_i32_37 = arith.constant 0 : i32
    %50 = arith.cmpi ne, %49, %c0_i32_37 : i32
    scf.if %50 {
      %c0_38 = arith.constant 0 : index
      %c0_39 = arith.constant 0 : index
      %c0_40 = arith.constant 0 : index
      %51 = vector.load %arg12[%c0_38, %c0_39, %c0_40] : memref<1x256x32xf32, #tpu.memory_space<vmem>>, vector<1x256x32xf32>
      %52 = vector.shape_cast %51 : vector<1x256x32xf32> to vector<256x32xf32>
      %53 = vector.shape_cast %28 : vector<256x32xf32> to vector<1x256x32xf32>
      tpu.vector_store %arg12[%c0_38, %c0_39, %c0_40], %53 {strides = array<i32>} : memref<1x256x32xf32, #tpu.memory_space<vmem>>, vector<1x256x32xf32>,
      %c0_41 = arith.constant 0 : index
      %c0_42 = arith.constant 0 : index
      %c0_43 = arith.constant 0 : index
      %54 = vector.load %arg13[%c0_41, %c0_42, %c0_43] : memref<1x64x32xf32, #tpu.memory_space<vmem>>, vector<1x64x32xf32>
      %55 = vector.shape_cast %54 : vector<1x64x32xf32> to vector<64x32xf32>
      %56 = vector.shape_cast %46 : vector<64x32xf32> to vector<1x64x32xf32>
      tpu.vector_store %arg13[%c0_41, %c0_42, %c0_43], %56 {strides = array<i32>} : memref<1x64x32xf32, #tpu.memory_space<vmem>>, vector<1x64x32xf32>,
    } else {
    }
    return
  }
  func.func @transform_0(%arg0: i32, %arg1: i32) -> (i32, i32) {
    %c0_i32 = arith.constant 0 : i32
    %c0_i32_0 = arith.constant 0 : i32
    %c0_i32_1 = arith.constant 0 : i32
    return %c0_i32, %c0_i32_0 : i32, i32
  }
  func.func @transform_1(%arg0: i32, %arg1: i32) -> (i32, i32) {
    %c0_i32 = arith.constant 0 : i32
    %c0_i32_0 = arith.constant 0 : i32
    %c0_i32_1 = arith.constant 0 : i32
    return %c0_i32, %c0_i32_0 : i32, i32
  }
  func.func @transform_2(%arg0: i32, %arg1: i32) -> (i32, i32) {
    %c0_i32 = arith.constant 0 : i32
    %c0_i32_0 = arith.constant 0 : i32
    %c0_i32_1 = arith.constant 0 : i32
    return %c0_i32, %c0_i32_0 : i32, i32
  }
  func.func @transform_3(%arg0: i32, %arg1: i32) -> (i32, i32, i32) {
    %c0_i32 = arith.constant 0 : i32
    %c0_i32_0 = arith.constant 0 : i32
    %c0_i32_1 = arith.constant 0 : i32
    return %arg0, %c0_i32, %c0_i32_0 : i32, i32, i32
  }
  func.func @transform_4(%arg0: i32, %arg1: i32) -> (i32, i32) {
    %c0_i32 = arith.constant 0 : i32
    %c0_i32_0 = arith.constant 0 : i32
    %c0_i32_1 = arith.constant 0 : i32
    return %c0_i32, %c0_i32_0 : i32, i32
  }
  func.func @transform_5(%arg0: i32, %arg1: i32) -> (i32, i32) {
    %c0_i32 = arith.constant 0 : i32
    %c0_i32_0 = arith.constant 0 : i32
    %c0_i32_1 = arith.constant 0 : i32
    return %c0_i32, %c0_i32_0 : i32, i32
  }
  func.func @transform_6(%arg0: i32, %arg1: i32) -> (i32, i32) {
    %c0_i32 = arith.constant 0 : i32
    %c0_i32_0 = arith.constant 0 : i32
    %c0_i32_1 = arith.constant 0 : i32
    return %c0_i32, %c0_i32_0 : i32, i32
  }
  func.func @transform_7(%arg0: i32, %arg1: i32) -> (i32, i32) {
    %c0_i32 = arith.constant 0 : i32
    %c0_i32_0 = arith.constant 0 : i32
    %c0_i32_1 = arith.constant 0 : i32
    return %c0_i32, %c0_i32_0 : i32, i32
  }
  func.func @transform_8(%arg0: i32, %arg1: i32) -> (i32, i32) {
    %c0_i32 = arith.constant 0 : i32
    %c0_i32_0 = arith.constant 0 : i32
    %c0_i32_1 = arith.constant 0 : i32
    return %c0_i32, %c0_i32_0 : i32, i32
  }
  func.func @transform_9(%arg0: i32, %arg1: i32) -> (i32, i32) {
    %c0_i32 = arith.constant 0 : i32
    %c0_i32_0 = arith.constant 0 : i32
    %c0_i32_1 = arith.constant 0 : i32
    return %c0_i32, %c0_i32_0 : i32, i32
  }
  func.func @transform_10(%arg0: i32, %arg1: i32) -> (i32, i32, i32) {
    %c0_i32 = arith.constant 0 : i32
    %c0_i32_0 = arith.constant 0 : i32
    %c0_i32_1 = arith.constant 0 : i32
    return %arg0, %c0_i32, %c0_i32_0 : i32, i32, i32
  }
  func.func @transform_11(%arg0: i32, %arg1: i32) -> (i32, i32, i32) {
    %c0_i32 = arith.constant 0 : i32
    %c0_i32_0 = arith.constant 0 : i32
    %c0_i32_1 = arith.constant 0 : i32
    return %arg0, %c0_i32, %c0_i32_0 : i32, i32, i32
  }
}

</mosaic_0001>

<llo_original>
// kernel: tpu_custom_call.1
$region0: #{tpu_custom_call.1}
  #allocation0 [shape = 'u32[]', space=smem, size = 0x4, offset = 0x4, fixed_abs, tag = 'smem constant byte address 0x4 - core index']
  #allocation1 [shape = 'u32[72,128]{1,0:T(1,128)}', space=vmem, size = 0x9000, scoped, tag = 'internal scratch']
  #allocation2 [shape = 'f32[64,32]{1,0:T(8,128)}', space=vmem, size = 0x8000, scoped, tag = 'scratch operand']
  %s0 = inlined_call_operand.vmem [shape: s32[256,1], index: 0, kind: input, shape index: {}]
  %s1 = inlined_call_operand.vmem [shape: s32[256,1], index: 1, kind: input, shape index: {}]
  %s2 = inlined_call_operand.vmem [shape: s32[1,256], index: 2, kind: input, shape index: {}]
  %s3 = inlined_call_operand.vmem [shape: f32[2,64,32], index: 3, kind: input, shape index: {}]
  %s4 = inlined_call_operand.vmem [shape: f32[32,32], index: 4, kind: input, shape index: {}]
  %s5 = inlined_call_operand.vmem [shape: f32[32,32], index: 5, kind: input, shape index: {}]
  %s6 = inlined_call_operand.vmem [shape: f32[1,32], index: 6, kind: input, shape index: {}]
  %s7 = inlined_call_operand.vmem [shape: f32[32,32], index: 7, kind: input, shape index: {}]
  %s8 = inlined_call_operand.vmem [shape: f32[32,32], index: 8, kind: input, shape index: {}]
  %s9 = inlined_call_operand.vmem [shape: f32[1,32], index: 9, kind: input, shape index: {}]
  %s10 = inlined_call_operand.vmem [shape: f32[2,256,32], index: 10, kind: output, shape index: {0}]
  %s11 = inlined_call_operand.vmem [shape: f32[2,64,32], index: 11, kind: output, shape index: {1}]
  %12 = xla_tuple %s10, %s11
  %s13 = sld [smem:[#allocation0]]
  $region89: #{tpu_custom_call.1} parent=0
    _
  %s15 = ssub.s32 1, %s13
  %s16 = scalar_select 0, %s15, %s13
  loop: start=0, step=1, limit=4
  $region2: #{tpu_custom_call.1} parent=0 // loop_pre_header
    _
  $region3: #{tpu_custom_call.1} parent=0 // loop_header
    %s18 = sphi 0, %s22
    %p19 = scmp.ge.s32.totalorder %s18, 4
    %s25 = sphi 0, %s37
    %s26 = sphi 0, %s33
    %s27 = sphi 0, %s25
    %s28 = sphi 0, %s26
    %s29 = sphi 0, %s27
    %s30 = sphi 0, %s28
    %s38 = sphi 0, %s38
    %s40 = sphi 0, %s38
    %s41 = sphi 0, %s40
    %s55 = sphi 0, %s41
    %s59 = sphi 0, %s59
    %s61 = sphi 0, %s59
    %s62 = sphi 0, %s61
    %s76 = sphi 0, %s62
    %s80 = sphi 0, %s80
    %s82 = sphi 0, %s80
    %s83 = sphi 0, %s82
    %s97 = sphi 0, %s83
    %s103 = sphi 0, %s105
    %s106 = sphi 0, %s103
    %s107 = sphi 0, %s106
    %s123 = sphi 0, %s107
    %s127 = sphi 0, %s127
    %s129 = sphi 0, %s127
    %s130 = sphi 0, %s129
    %s144 = sphi 0, %s130
    %s148 = sphi 0, %s148
    %s150 = sphi 0, %s148
    %s151 = sphi 0, %s150
    %s165 = sphi 0, %s151
    %s169 = sphi 0, %s169
    %s171 = sphi 0, %s169
    %s172 = sphi 0, %s171
    %s186 = sphi 0, %s172
    %s190 = sphi 0, %s190
    %s192 = sphi 0, %s190
    %s193 = sphi 0, %s192
    %s207 = sphi 0, %s193
    %s211 = sphi 0, %s211
    %s213 = sphi 0, %s211
    %s214 = sphi 0, %s213
    %s228 = sphi 0, %s214
    %s232 = sphi 0, %s232
    %s234 = sphi 0, %s232
    %s235 = sphi 0, %s234
    %s249 = sphi 0, %s235
    %s255 = sphi 0, %s257
    %s258 = sphi 0, %s255
    %s259 = sphi 0, %s258
    %s275 = sphi 0, %s259
    %s281 = sphi 0, %s283
    %s284 = sphi 0, %s281
    %s285 = sphi 0, %s284
    %s301 = sphi 0, %s285
  $region4: #{tpu_custom_call.1} parent=0 // loop_header_branch
    %21 = sbr.rel (%p19) target = $region8
  $region5: #{tpu_custom_call.1} parent=0 // loop_body
    %s23 = ssub.s32 %s18, 1
    %s24 = ssub.s32 %s18, 2
    %s31 = sadd.s32 1, %s26
    %p32 = scmp.ge.s32.totalorder %s31, 1
    %s33 = scalar_select %p32, 0, %s31
    %s34 = sadd.s32 1, %s25
    %s35 = scalar_select %p32, %s34, %s25
    %p36 = scmp.ge.s32.totalorder %s35, 2
    %s37 = scalar_select %p36, 0, %s35
    %s39 = sadd.s32 %s38, 1
    %p42 = scmp.eq.s32.totalorder %s18, 1
    %p43 = scmp.ne.s32.totalorder %s38, %s40
    %p44 = scmp.eq.s32.totalorder %s18, 0
    %p45 = por %p43, %p44
    %p46 = scmp.ne.s32.totalorder %s38, %s40
    %p47 = scmp.eq.s32.totalorder %s23, 1
    %p48 = por %p46, %p47
    %p49 = scmp.ne.s32.totalorder %s40, %s41
    %p50 = scmp.eq.s32.totalorder %s23, 0
    %p51 = por %p49, %p50
    %p52 = scmp.ne.s32.totalorder %s40, %s41
    %p53 = scmp.eq.s32.totalorder %s24, 1
    %p54 = por %p52, %p53
    %p56 = scmp.ne.s32.totalorder %s41, %s55
    %p57 = scmp.eq.s32.totalorder %s24, 0
    %p58 = por %p56, %p57
    %s60 = sadd.s32 %s59, 1
    %p63 = scmp.eq.s32.totalorder %s18, 1
    %p64 = scmp.ne.s32.totalorder %s59, %s61
    %p65 = scmp.eq.s32.totalorder %s18, 0
    %p66 = por %p64, %p65
    %p67 = scmp.ne.s32.totalorder %s59, %s61
    %p68 = scmp.eq.s32.totalorder %s23, 1
    %p69 = por %p67, %p68
    %p70 = scmp.ne.s32.totalorder %s61, %s62
    %p71 = scmp.eq.s32.totalorder %s23, 0
    %p72 = por %p70, %p71
    %p73 = scmp.ne.s32.totalorder %s61, %s62
    %p74 = scmp.eq.s32.totalorder %s24, 1
    %p75 = por %p73, %p74
    %p77 = scmp.ne.s32.totalorder %s62, %s76
    %p78 = scmp.eq.s32.totalorder %s24, 0
    %p79 = por %p77, %p78
    %s81 = sadd.s32 %s80, 1
    %p84 = scmp.eq.s32.totalorder %s18, 1
    %p85 = scmp.ne.s32.totalorder %s80, %s82
    %p86 = scmp.eq.s32.totalorder %s18, 0
    %p87 = por %p85, %p86
    %p88 = scmp.ne.s32.totalorder %s80, %s82
    %p89 = scmp.eq.s32.totalorder %s23, 1
    %p90 = por %p88, %p89
    %p91 = scmp.ne.s32.totalorder %s82, %s83
    %p92 = scmp.eq.s32.totalorder %s23, 0
    %p93 = por %p91, %p92
    %p94 = scmp.ne.s32.totalorder %s82, %s83
    %p95 = scmp.eq.s32.totalorder %s24, 1
    %p96 = por %p94, %p95
    %p98 = scmp.ne.s32.totalorder %s83, %s97
    %p99 = scmp.eq.s32.totalorder %s24, 0
    %p100 = por %p98, %p99
    %s101 = ssub.s32 %s25, %s37
    %p102 = scmp.eq.s32.totalorder %s101, 0
    %s104 = sadd.s32 %s103, 1
    %s105 = scalar_select %p102, %s103, %s104
    %p108 = pneg %p102
    %p109 = scmp.eq.s32.totalorder %s18, 1
    %p110 = por %p108, %p109
    %p111 = scmp.ne.s32.totalorder %s103, %s106
    %p112 = scmp.eq.s32.totalorder %s18, 0
    %p113 = por %p111, %p112
    %p114 = scmp.ne.s32.totalorder %s103, %s106
    %p115 = scmp.eq.s32.totalorder %s23, 1
    %p116 = por %p114, %p115
    %p117 = scmp.ne.s32.totalorder %s106, %s107
    %p118 = scmp.eq.s32.totalorder %s23, 0
    %p119 = por %p117, %p118
    %p120 = scmp.ne.s32.totalorder %s106, %s107
    %p121 = scmp.eq.s32.totalorder %s24, 1
    %p122 = por %p120, %p121
    %p124 = scmp.ne.s32.totalorder %s107, %s123
    %p125 = scmp.eq.s32.totalorder %s24, 0
    %p126 = por %p124, %p125
    %s128 = sadd.s32 %s127, 1
    %p131 = scmp.eq.s32.totalorder %s18, 1
    %p132 = scmp.ne.s32.totalorder %s127, %s129
    %p133 = scmp.eq.s32.totalorder %s18, 0
    %p134 = por %p132, %p133
    %p135 = scmp.ne.s32.totalorder %s127, %s129
    %p136 = scmp.eq.s32.totalorder %s23, 1
    %p137 = por %p135, %p136
    %p138 = scmp.ne.s32.totalorder %s129, %s130
    %p139 = scmp.eq.s32.totalorder %s23, 0
    %p140 = por %p138, %p139
    %p141 = scmp.ne.s32.totalorder %s129, %s130
    %p142 = scmp.eq.s32.totalorder %s24, 1
    %p143 = por %p141, %p142
    %p145 = scmp.ne.s32.totalorder %s130, %s144
    %p146 = scmp.eq.s32.totalorder %s24, 0
    %p147 = por %p145, %p146
    %s149 = sadd.s32 %s148, 1
    %p152 = scmp.eq.s32.totalorder %s18, 1
    %p153 = scmp.ne.s32.totalorder %s148, %s150
    %p154 = scmp.eq.s32.totalorder %s18, 0
    %p155 = por %p153, %p154
    %p156 = scmp.ne.s32.totalorder %s148, %s150
    %p157 = scmp.eq.s32.totalorder %s23, 1
    %p158 = por %p156, %p157
    %p159 = scmp.ne.s32.totalorder %s150, %s151
    %p160 = scmp.eq.s32.totalorder %s23, 0
    %p161 = por %p159, %p160
    %p162 = scmp.ne.s32.totalorder %s150, %s151
    %p163 = scmp.eq.s32.totalorder %s24, 1
    %p164 = por %p162, %p163
    %p166 = scmp.ne.s32.totalorder %s151, %s165
    %p167 = scmp.eq.s32.totalorder %s24, 0
    %p168 = por %p166, %p167
    %s170 = sadd.s32 %s169, 1
    %p173 = scmp.eq.s32.totalorder %s18, 1
    %p174 = scmp.ne.s32.totalorder %s169, %s171
    %p175 = scmp.eq.s32.totalorder %s18, 0
    %p176 = por %p174, %p175
    %p177 = scmp.ne.s32.totalorder %s169, %s171
    %p178 = scmp.eq.s32.totalorder %s23, 1
    %p179 = por %p177, %p178
    %p180 = scmp.ne.s32.totalorder %s171, %s172
    %p181 = scmp.eq.s32.totalorder %s23, 0
    %p182 = por %p180, %p181
    %p183 = scmp.ne.s32.totalorder %s171, %s172
    %p184 = scmp.eq.s32.totalorder %s24, 1
    %p185 = por %p183, %p184
    %p187 = scmp.ne.s32.totalorder %s172, %s186
    %p188 = scmp.eq.s32.totalorder %s24, 0
    %p189 = por %p187, %p188
    %s191 = sadd.s32 %s190, 1
    %p194 = scmp.eq.s32.totalorder %s18, 1
    %p195 = scmp.ne.s32.totalorder %s190, %s192
    %p196 = scmp.eq.s32.totalorder %s18, 0
    %p197 = por %p195, %p196
    %p198 = scmp.ne.s32.totalorder %s190, %s192
    %p199 = scmp.eq.s32.totalorder %s23, 1
    %p200 = por %p198, %p199
    %p201 = scmp.ne.s32.totalorder %s192, %s193
    %p202 = scmp.eq.s32.totalorder %s23, 0
    %p203 = por %p201, %p202
    %p204 = scmp.ne.s32.totalorder %s192, %s193
    %p205 = scmp.eq.s32.totalorder %s24, 1
    %p206 = por %p204, %p205
    %p208 = scmp.ne.s32.totalorder %s193, %s207
    %p209 = scmp.eq.s32.totalorder %s24, 0
    %p210 = por %p208, %p209
    %s212 = sadd.s32 %s211, 1
    %p215 = scmp.eq.s32.totalorder %s18, 1
    %p216 = scmp.ne.s32.totalorder %s211, %s213
    %p217 = scmp.eq.s32.totalorder %s18, 0
    %p218 = por %p216, %p217
    %p219 = scmp.ne.s32.totalorder %s211, %s213
    %p220 = scmp.eq.s32.totalorder %s23, 1
    %p221 = por %p219, %p220
    %p222 = scmp.ne.s32.totalorder %s213, %s214
    %p223 = scmp.eq.s32.totalorder %s23, 0
    %p224 = por %p222, %p223
    %p225 = scmp.ne.s32.totalorder %s213, %s214
    %p226 = scmp.eq.s32.totalorder %s24, 1
    %p227 = por %p225, %p226
    %p229 = scmp.ne.s32.totalorder %s214, %s228
    %p230 = scmp.eq.s32.totalorder %s24, 0
    %p231 = por %p229, %p230
    %s233 = sadd.s32 %s232, 1
    %p236 = scmp.eq.s32.totalorder %s18, 1
    %p237 = scmp.ne.s32.totalorder %s232, %s234
    %p238 = scmp.eq.s32.totalorder %s18, 0
    %p239 = por %p237, %p238
    %p240 = scmp.ne.s32.totalorder %s232, %s234
    %p241 = scmp.eq.s32.totalorder %s23, 1
    %p242 = por %p240, %p241
    %p243 = scmp.ne.s32.totalorder %s234, %s235
    %p244 = scmp.eq.s32.totalorder %s23, 0
    %p245 = por %p243, %p244
    %p246 = scmp.ne.s32.totalorder %s234, %s235
    %p247 = scmp.eq.s32.totalorder %s24, 1
    %p248 = por %p246, %p247
    %p250 = scmp.ne.s32.totalorder %s235, %s249
    %p251 = scmp.eq.s32.totalorder %s24, 0
    %p252 = por %p250, %p251
    %s253 = ssub.s32 %s25, %s37
    %p254 = scmp.eq.s32.totalorder %s253, 0
    %s256 = sadd.s32 %s255, 1
    %s257 = scalar_select %p254, %s255, %s256
    %p260 = pneg %p254
    %p261 = scmp.eq.s32.totalorder %s18, 1
    %p262 = por %p260, %p261
    %p263 = scmp.ne.s32.totalorder %s255, %s258
    %p264 = scmp.eq.s32.totalorder %s18, 0
    %p265 = por %p263, %p264
    %p266 = scmp.ne.s32.totalorder %s255, %s258
    %p267 = scmp.eq.s32.totalorder %s23, 1
    %p268 = por %p266, %p267
    %p269 = scmp.ne.s32.totalorder %s258, %s259
    %p270 = scmp.eq.s32.totalorder %s23, 0
    %p271 = por %p269, %p270
    %p272 = scmp.ne.s32.totalorder %s258, %s259
    %p273 = scmp.eq.s32.totalorder %s24, 1
    %p274 = por %p272, %p273
    %p276 = scmp.ne.s32.totalorder %s259, %s275
    %p277 = scmp.eq.s32.totalorder %s24, 0
    %p278 = por %p276, %p277
    %s279 = ssub.s32 %s25, %s37
    %p280 = scmp.eq.s32.totalorder %s279, 0
    %s282 = sadd.s32 %s281, 1
    %s283 = scalar_select %p280, %s281, %s282
    %p286 = pneg %p280
    %p287 = scmp.eq.s32.totalorder %s18, 1
    %p288 = por %p286, %p287
    %p289 = scmp.ne.s32.totalorder %s281, %s284
    %p290 = scmp.eq.s32.totalorder %s18, 0
    %p291 = por %p289, %p290
    %p292 = scmp.ne.s32.totalorder %s281, %s284
    %p293 = scmp.eq.s32.totalorder %s23, 1
    %p294 = por %p292, %p293
    %p295 = scmp.ne.s32.totalorder %s284, %s285
    %p296 = scmp.eq.s32.totalorder %s23, 0
    %p297 = por %p295, %p296
    %p298 = scmp.ne.s32.totalorder %s284, %s285
    %p299 = scmp.eq.s32.totalorder %s24, 1
    %p300 = por %p298, %p299
    %p302 = scmp.ne.s32.totalorder %s285, %s301
    %p303 = scmp.eq.s32.totalorder %s24, 0
    %p304 = por %p302, %p303
    %p305 = scmp.le.s32.totalorder 1, %s18
    %p306 = scmp.lt.s32.totalorder %s18, 3
    %p307 = pnand %p305, %p306
    %p308 = pneg %p307
    // Predicated region
    $region9: #{tpu_custom_call.1} parent=5 // pred_check
      _
    $region10: #{tpu_custom_call.1} parent=5 // pred_check_branch
      %310 = sbr.rel (%p307) target = $region12
    $region11: #{tpu_custom_call.1} parent=5 // pred_region
      %s311 = ssub.s32 %s18, 1
      // Predicated region
      $region13: #{tpu_custom_call.1} parent=11 // pred_check
        %p312 = pneg %p51
      $region14: #{tpu_custom_call.1} parent=11 // pred_check_branch
        %314 = sbr.rel (%p312) target = $region16
      $region15: #{tpu_custom_call.1} parent=11 // pred_region
        _
      $region16: #{tpu_custom_call.1} parent=11 // pred_fallthru
        _
      // Predicated region
      $region17: #{tpu_custom_call.1} parent=11 // pred_check
        %p315 = pneg %p72
      $region18: #{tpu_custom_call.1} parent=11 // pred_check_branch
        %317 = sbr.rel (%p315) target = $region20
      $region19: #{tpu_custom_call.1} parent=11 // pred_region
        _
      $region20: #{tpu_custom_call.1} parent=11 // pred_fallthru
        _
      // Predicated region
      $region21: #{tpu_custom_call.1} parent=11 // pred_check
        %p318 = pneg %p93
      $region22: #{tpu_custom_call.1} parent=11 // pred_check_branch
        %320 = sbr.rel (%p318) target = $region24
      $region23: #{tpu_custom_call.1} parent=11 // pred_region
        _
      $region24: #{tpu_custom_call.1} parent=11 // pred_fallthru
        _
      // Predicated region
      $region25: #{tpu_custom_call.1} parent=11 // pred_check
        %p321 = pneg %p140
      $region26: #{tpu_custom_call.1} parent=11 // pred_check_branch
        %323 = sbr.rel (%p321) target = $region28
      $region27: #{tpu_custom_call.1} parent=11 // pred_region
        _
      $region28: #{tpu_custom_call.1} parent=11 // pred_fallthru
        _
      // Predicated region
      $region29: #{tpu_custom_call.1} parent=11 // pred_check
        %p324 = pneg %p161
      $region30: #{tpu_custom_call.1} parent=11 // pred_check_branch
        %326 = sbr.rel (%p324) target = $region32
      $region31: #{tpu_custom_call.1} parent=11 // pred_region
        _
      $region32: #{tpu_custom_call.1} parent=11 // pred_fallthru
        _
      // Predicated region
      $region33: #{tpu_custom_call.1} parent=11 // pred_check
        %p327 = pneg %p182
      $region34: #{tpu_custom_call.1} parent=11 // pred_check_branch
        %329 = sbr.rel (%p327) target = $region36
      $region35: #{tpu_custom_call.1} parent=11 // pred_region
        _
      $region36: #{tpu_custom_call.1} parent=11 // pred_fallthru
        _
      // Predicated region
      $region37: #{tpu_custom_call.1} parent=11 // pred_check
        %p330 = pneg %p203
      $region38: #{tpu_custom_call.1} parent=11 // pred_check_branch
        %332 = sbr.rel (%p330) target = $region40
      $region39: #{tpu_custom_call.1} parent=11 // pred_region
        _
      $region40: #{tpu_custom_call.1} parent=11 // pred_fallthru
        _
      // Predicated region
      $region41: #{tpu_custom_call.1} parent=11 // pred_check
        %p333 = pneg %p224
      $region42: #{tpu_custom_call.1} parent=11 // pred_check_branch
        %335 = sbr.rel (%p333) target = $region44
      $region43: #{tpu_custom_call.1} parent=11 // pred_region
        _
      $region44: #{tpu_custom_call.1} parent=11 // pred_fallthru
        _
      // Predicated region
      $region45: #{tpu_custom_call.1} parent=11 // pred_check
        %p336 = pneg %p245
      $region46: #{tpu_custom_call.1} parent=11 // pred_check_branch
        %338 = sbr.rel (%p336) target = $region48
      $region47: #{tpu_custom_call.1} parent=11 // pred_region
        _
      $region48: #{tpu_custom_call.1} parent=11 // pred_fallthru
        _
    $region12: #{tpu_custom_call.1} parent=5 // pred_fallthru
      _
    %p339 = scmp.lt.s32.totalorder %s18, 2
    // Predicated region
    $region49: #{tpu_custom_call.1} parent=5 // pred_check
      %p340 = pneg %p339
    $region50: #{tpu_custom_call.1} parent=5 // pred_check_branch
      %342 = sbr.rel (%p340) target = $region52
    $region51: #{tpu_custom_call.1} parent=5 // pred_region
      // Predicated region
      $region53: #{tpu_custom_call.1} parent=51 // pred_check
        %p343 = pneg %p113
      $region54: #{tpu_custom_call.1} parent=51 // pred_check_branch
        %345 = sbr.rel (%p343) target = $region56
      $region55: #{tpu_custom_call.1} parent=51 // pred_region
        %p346 = scmp.lt.s32.totalorder %s25, 1
        %s347 = scalar_select %p346, %s25, 1
        %s348 = smul.addr %s347, 8
        %s349 = smul.addr %s348, 8
        %s350 = scalar_lea.vmem %s3, %s349
      $region56: #{tpu_custom_call.1} parent=51 // pred_fallthru
        _
    $region52: #{tpu_custom_call.1} parent=5 // pred_fallthru
      _
    %p351 = scmp.le.s32.totalorder 1, %s18
    %p352 = scmp.lt.s32.totalorder %s18, 3
    %p353 = pnand %p351, %p352
    %p354 = pneg %p353
    // Predicated region
    $region57: #{tpu_custom_call.1} parent=5 // pred_check
      _
    $region58: #{tpu_custom_call.1} parent=5 // pred_check_branch
      %356 = sbr.rel (%p353) target = $region60
    $region59: #{tpu_custom_call.1} parent=5 // pred_region
      %s357 = ssub.s32 %s18, 1
      %p358 = pneg %p51
      %p359 = pneg %p48
      %p360 = pneg %p72
      %p361 = pneg %p69
      %p362 = pneg %p93
      %p363 = pneg %p90
      %p364 = scmp.lt.s32.totalorder %s27, 1
      %s365 = scalar_select %p364, %s27, 1
      %s366 = smul.addr %s365, 8
      %s367 = smul.addr %s366, 8
      %s368 = scalar_lea.vmem %s3, %s367
      %p369 = pneg %p119
      %p370 = pneg %p116
      %p371 = pneg %p140
      %p372 = pneg %p137
      %p373 = pneg %p161
      %p374 = pneg %p158
      %p375 = pneg %p182
      %p376 = pneg %p179
      %p377 = pneg %p203
      %p378 = pneg %p200
      %p379 = pneg %p224
      %p380 = pneg %p221
      %p381 = pneg %p245
      %p382 = pneg %p242
      %p383 = pneg %p271
      %p384 = pneg %p268
      %p385 = scmp.lt.s32.totalorder %s27, 1
      %s386 = scalar_select %p385, %s27, 1
      %s387 = smul.addr %s386, 32
      %s388 = smul.addr %s387, 8
      %s389 = scalar_lea.vmem %s10, %s388
      %p390 = pneg %p297
      %p391 = pneg %p294
      %p392 = scmp.lt.s32.totalorder %s27, 1
      %s393 = scalar_select %p392, %s27, 1
      %s394 = smul.addr %s393, 8
      %s395 = smul.addr %s394, 8
      %s396 = scalar_lea.vmem %s11, %s395
      %p397 = scmp.lt.s32.totalorder %s27, 1
      %s398 = scalar_select %p397, %s27, 1
      %s399 = smul.addr %s398, 8
      %s400 = smul.addr %s399, 8
      %s401 = scalar_lea.vmem %s3, %s400
      %p402 = scmp.lt.s32.totalorder %s27, 1
      %s403 = scalar_select %p402, %s27, 1
      %s404 = smul.addr %s403, 32
      %s405 = smul.addr %s404, 8
      %s406 = scalar_lea.vmem %s10, %s405
      %p407 = scmp.lt.s32.totalorder %s27, 1
      %s408 = scalar_select %p407, %s27, 1
      %s409 = smul.addr %s408, 8
      %s410 = smul.addr %s409, 8
      %s411 = scalar_lea.vmem %s11, %s410
      %p412 = scmp.eq.s32.totalorder %s28, 0
      // Predicated region
      $region61: #{tpu_custom_call.1} parent=59 // pred_check
        %p413 = pneg %p412
      $region62: #{tpu_custom_call.1} parent=59 // pred_check_branch
        %415 = sbr.rel (%p413) target = $region64
      $region63: #{tpu_custom_call.1} parent=59 // pred_region
        %v416 = vld [vmem:[%s401] sm:$0xff]
        %v417 = vld [vmem:[%s401 + $0x8] sm:$0xff]
        %v418 = vld [vmem:[%s401 + $0x10] sm:$0xff]
        %v419 = vld [vmem:[%s401 + $0x18] sm:$0xff]
        %v420 = vld [vmem:[%s401 + $0x20] sm:$0xff]
        %v421 = vld [vmem:[%s401 + $0x28] sm:$0xff]
        %v422 = vld [vmem:[%s401 + $0x30] sm:$0xff]
        %v423 = vld [vmem:[%s401 + $0x38] sm:$0xff]
        %vm424 = vcmask 261120
        %425 = vst.msk [vmem:[#allocation2] sm:$0xff] %vm424, %v416
        %426 = vst.msk [vmem:[#allocation2 + $0x8] sm:$0xff] %vm424, %v417
        %427 = vst.msk [vmem:[#allocation2 + $0x10] sm:$0xff] %vm424, %v418
        %428 = vst.msk [vmem:[#allocation2 + $0x18] sm:$0xff] %vm424, %v419
        %429 = vst.msk [vmem:[#allocation2 + $0x20] sm:$0xff] %vm424, %v420
        %430 = vst.msk [vmem:[#allocation2 + $0x28] sm:$0xff] %vm424, %v421
        %431 = vst.msk [vmem:[#allocation2 + $0x30] sm:$0xff] %vm424, %v422
        %432 = vst.msk [vmem:[#allocation2 + $0x38] sm:$0xff] %vm424, %v423
      $region64: #{tpu_custom_call.1} parent=59 // pred_fallthru
        _
      %v433 = vld [vmem:[#allocation2] sm:$0xff]
      %v434 = vld [vmem:[#allocation2 + $0x8] sm:$0xff]
      %v435 = vld [vmem:[#allocation2 + $0x10] sm:$0xff]
      %v436 = vld [vmem:[#allocation2 + $0x18] sm:$0xff]
      %v437 = vld [vmem:[#allocation2 + $0x20] sm:$0xff]
      %v438 = vld [vmem:[#allocation2 + $0x28] sm:$0xff]
      %v439 = vld [vmem:[#allocation2 + $0x30] sm:$0xff]
      %v440 = vld [vmem:[#allocation2 + $0x38] sm:$0xff]
      %v441 = vld [vmem:[%s4] sm:$0xff]
      %v442 = vld [vmem:[%s4 + $0x8] sm:$0xff]
      %v443 = vld [vmem:[%s4 + $0x10] sm:$0xff]
      %v444 = vld [vmem:[%s4 + $0x18] sm:$0xff]
      %vm445 = vcmask 261120
      %v447 = vsel %vm445, %v433, 0
      %v450 = vsel %vm445, %v434, 0
      %v453 = vsel %vm445, %v435, 0
      %v456 = vsel %vm445, %v436, 0
      %v459 = vsel %vm445, %v437, 0
      %v462 = vsel %vm445, %v438, 0
      %v465 = vsel %vm445, %v439, 0
      %v468 = vsel %vm445, %v440, 0
      %470 = vmatpush.msra.mxu0 0.0
      %471 = vmatpush.msra.mxu0 0.0
      %472 = vmatpush.msra.mxu0 0.0
      %473 = vmatpush.msra.mxu0 0.0
      %474 = vmatpush.msra.mxu0 0.0
      %475 = vmatpush.msra.mxu0 0.0
      %476 = vmatpush.msra.mxu0 0.0
      %477 = vmatpush.msra.mxu0 0.0
      %478 = vmatpush.msra.mxu0 0.0
      %479 = vmatpush.msra.mxu0 0.0
      %480 = vmatpush.msra.mxu0 0.0
      %481 = vmatpush.msra.mxu0 0.0
      %482 = vmatpush.msra.mxu0 %v444
      %483 = vmatpush.msra.mxu0 %v443
      %484 = vmatpush.msra.mxu0 %v442
      %485 = vmatpush.msra.mxu0 %v441
      %486 = vmatmul.f32.gmra.mxu0 %v447
      %v487 = vpop.f32.mrf.mxu0
      %v488 = vadd.f32 0.0, %v487
      %489 = vmatmul.f32.gmra.mxu0 %v450
      %v490 = vpop.f32.mrf.mxu0
      %v491 = vadd.f32 0.0, %v490
      %492 = vmatmul.f32.gmra.mxu0 %v453
      %v493 = vpop.f32.mrf.mxu0
      %v494 = vadd.f32 0.0, %v493
      %495 = vmatmul.f32.gmra.mxu0 %v456
      %v496 = vpop.f32.mrf.mxu0
      %v497 = vadd.f32 0.0, %v496
      %498 = vmatmul.f32.gmra.mxu0 %v459
      %v499 = vpop.f32.mrf.mxu0
      %v500 = vadd.f32 0.0, %v499
      %501 = vmatmul.f32.gmra.mxu0 %v462
      %v502 = vpop.f32.mrf.mxu0
      %v503 = vadd.f32 0.0, %v502
      %504 = vmatmul.f32.gmra.mxu0 %v465
      %v505 = vpop.f32.mrf.mxu0
      %v506 = vadd.f32 0.0, %v505
      %507 = vmatmul.f32.gmra.mxu0 %v468
      %v508 = vpop.f32.mrf.mxu0
      %v509 = vadd.f32 0.0, %v508
      %510 = vdwg.mxu0
      %v511 = vld [vmem:[%s5] sm:$0xff]
      %v512 = vld [vmem:[%s5 + $0x8] sm:$0xff]
      %v513 = vld [vmem:[%s5 + $0x10] sm:$0xff]
      %v514 = vld [vmem:[%s5 + $0x18] sm:$0xff]
      %515 = vmatpush.msra.mxu0 0.0
      %516 = vmatpush.msra.mxu0 0.0
      %517 = vmatpush.msra.mxu0 0.0
      %518 = vmatpush.msra.mxu0 0.0
      %519 = vmatpush.msra.mxu0 0.0
      %520 = vmatpush.msra.mxu0 0.0
      %521 = vmatpush.msra.mxu0 0.0
      %522 = vmatpush.msra.mxu0 0.0
      %523 = vmatpush.msra.mxu0 0.0
      %524 = vmatpush.msra.mxu0 0.0
      %525 = vmatpush.msra.mxu0 0.0
      %526 = vmatpush.msra.mxu0 0.0
      %527 = vmatpush.msra.mxu0 %v514
      %528 = vmatpush.msra.mxu0 %v513
      %529 = vmatpush.msra.mxu0 %v512
      %530 = vmatpush.msra.mxu0 %v511
      %531 = vmatmul.f32.gmra.mxu0 %v447
      %v532 = vpop.f32.mrf.mxu0
      %v533 = vadd.f32 0.0, %v532
      %534 = vmatmul.f32.gmra.mxu0 %v450
      %v535 = vpop.f32.mrf.mxu0
      %v536 = vadd.f32 0.0, %v535
      %537 = vmatmul.f32.gmra.mxu0 %v453
      %v538 = vpop.f32.mrf.mxu0
      %v539 = vadd.f32 0.0, %v538
      %540 = vmatmul.f32.gmra.mxu0 %v456
      %v541 = vpop.f32.mrf.mxu0
      %v542 = vadd.f32 0.0, %v541
      %543 = vmatmul.f32.gmra.mxu0 %v459
      %v544 = vpop.f32.mrf.mxu0
      %v545 = vadd.f32 0.0, %v544
      %546 = vmatmul.f32.gmra.mxu0 %v462
      %v547 = vpop.f32.mrf.mxu0
      %v548 = vadd.f32 0.0, %v547
      %549 = vmatmul.f32.gmra.mxu0 %v465
      %v550 = vpop.f32.mrf.mxu0
      %v551 = vadd.f32 0.0, %v550
      %552 = vmatmul.f32.gmra.mxu0 %v468
      %v553 = vpop.f32.mrf.mxu0
      %v554 = vadd.f32 0.0, %v553
      %555 = vdwg.mxu0
      %v556 = vlaneseq
      %v557 = vand.u32 %v556, 127
      %v558 = vld [vmem:[%s0] sm:$0xff]
      %v559 = vld [vmem:[%s0 + $0x8] sm:$0xff]
      %v560 = vld [vmem:[%s0 + $0x10] sm:$0xff]
      %v561 = vld [vmem:[%s0 + $0x18] sm:$0xff]
      %v562 = vld [vmem:[%s0 + $0x20] sm:$0xff]
      %v563 = vld [vmem:[%s0 + $0x28] sm:$0xff]
      %v564 = vld [vmem:[%s0 + $0x30] sm:$0xff]
      %v565 = vld [vmem:[%s0 + $0x38] sm:$0xff]
      %v566 = vld [vmem:[%s0 + $0x40] sm:$0xff]
      %v567 = vld [vmem:[%s0 + $0x48] sm:$0xff]
      %v568 = vld [vmem:[%s0 + $0x50] sm:$0xff]
      %v569 = vld [vmem:[%s0 + $0x58] sm:$0xff]
      %v570 = vld [vmem:[%s0 + $0x60] sm:$0xff]
      %v571 = vld [vmem:[%s0 + $0x68] sm:$0xff]
      %v572 = vld [vmem:[%s0 + $0x70] sm:$0xff]
      %v573 = vld [vmem:[%s0 + $0x78] sm:$0xff]
      %v574 = vld [vmem:[%s0 + $0x80] sm:$0xff]
      %v575 = vld [vmem:[%s0 + $0x88] sm:$0xff]
      %v576 = vld [vmem:[%s0 + $0x90] sm:$0xff]
      %v577 = vld [vmem:[%s0 + $0x98] sm:$0xff]
      %v578 = vld [vmem:[%s0 + $0xa0] sm:$0xff]
      %v579 = vld [vmem:[%s0 + $0xa8] sm:$0xff]
      %v580 = vld [vmem:[%s0 + $0xb0] sm:$0xff]
      %v581 = vld [vmem:[%s0 + $0xb8] sm:$0xff]
      %v582 = vld [vmem:[%s0 + $0xc0] sm:$0xff]
      %v583 = vld [vmem:[%s0 + $0xc8] sm:$0xff]
      %v584 = vld [vmem:[%s0 + $0xd0] sm:$0xff]
      %v585 = vld [vmem:[%s0 + $0xd8] sm:$0xff]
      %v586 = vld [vmem:[%s0 + $0xe0] sm:$0xff]
      %v587 = vld [vmem:[%s0 + $0xe8] sm:$0xff]
      %v588 = vld [vmem:[%s0 + $0xf0] sm:$0xff]
      %v589 = vld [vmem:[%s0 + $0xf8] sm:$0xff]
      %590 = vset.pattern.permute.xlu0 0
      %591 = vperm.xlu0 %590, %v558
      %v592 = vpop.permute.xlu0 %591
      %593 = vset.pattern.permute.xlu0 0
      %594 = vperm.xlu0 %593, %v559
      %v595 = vpop.permute.xlu0 %594
      %596 = vset.pattern.permute.xlu0 0
      %597 = vperm.xlu0 %596, %v560
      %v598 = vpop.permute.xlu0 %597
      %599 = vset.pattern.permute.xlu0 0
      %600 = vperm.xlu0 %599, %v561
      %v601 = vpop.permute.xlu0 %600
      %602 = vset.pattern.permute.xlu0 0
      %603 = vperm.xlu0 %602, %v562
      %v604 = vpop.permute.xlu0 %603
      %605 = vset.pattern.permute.xlu0 0
      %606 = vperm.xlu0 %605, %v563
      %v607 = vpop.permute.xlu0 %606
      %608 = vset.pattern.permute.xlu0 0
      %609 = vperm.xlu0 %608, %v564
      %v610 = vpop.permute.xlu0 %609
      %611 = vset.pattern.permute.xlu0 0
      %612 = vperm.xlu0 %611, %v565
      %v613 = vpop.permute.xlu0 %612
      %614 = vset.pattern.permute.xlu0 0
      %615 = vperm.xlu0 %614, %v566
      %v616 = vpop.permute.xlu0 %615
      %617 = vset.pattern.permute.xlu0 0
      %618 = vperm.xlu0 %617, %v567
      %v619 = vpop.permute.xlu0 %618
      %620 = vset.pattern.permute.xlu0 0
      %621 = vperm.xlu0 %620, %v568
      %v622 = vpop.permute.xlu0 %621
      %623 = vset.pattern.permute.xlu0 0
      %624 = vperm.xlu0 %623, %v569
      %v625 = vpop.permute.xlu0 %624
      %626 = vset.pattern.permute.xlu0 0
      %627 = vperm.xlu0 %626, %v570
      %v628 = vpop.permute.xlu0 %627
      %629 = vset.pattern.permute.xlu0 0
      %630 = vperm.xlu0 %629, %v571
      %v631 = vpop.permute.xlu0 %630
      %632 = vset.pattern.permute.xlu0 0
      %633 = vperm.xlu0 %632, %v572
      %v634 = vpop.permute.xlu0 %633
      %635 = vset.pattern.permute.xlu0 0
      %636 = vperm.xlu0 %635, %v573
      %v637 = vpop.permute.xlu0 %636
      %638 = vset.pattern.permute.xlu0 0
      %639 = vperm.xlu0 %638, %v574
      %v640 = vpop.permute.xlu0 %639
      %641 = vset.pattern.permute.xlu0 0
      %642 = vperm.xlu0 %641, %v575
      %v643 = vpop.permute.xlu0 %642
      %644 = vset.pattern.permute.xlu0 0
      %645 = vperm.xlu0 %644, %v576
      %v646 = vpop.permute.xlu0 %645
      %647 = vset.pattern.permute.xlu0 0
      %648 = vperm.xlu0 %647, %v577
      %v649 = vpop.permute.xlu0 %648
      %650 = vset.pattern.permute.xlu0 0
      %651 = vperm.xlu0 %650, %v578
      %v652 = vpop.permute.xlu0 %651
      %653 = vset.pattern.permute.xlu0 0
      %654 = vperm.xlu0 %653, %v579
      %v655 = vpop.permute.xlu0 %654
      %656 = vset.pattern.permute.xlu0 0
      %657 = vperm.xlu0 %656, %v580
      %v658 = vpop.permute.xlu0 %657
      %659 = vset.pattern.permute.xlu0 0
      %660 = vperm.xlu0 %659, %v581
      %v661 = vpop.permute.xlu0 %660
      %662 = vset.pattern.permute.xlu0 0
      %663 = vperm.xlu0 %662, %v582
      %v664 = vpop.permute.xlu0 %663
      %665 = vset.pattern.permute.xlu0 0
      %666 = vperm.xlu0 %665, %v583
      %v667 = vpop.permute.xlu0 %666
      %668 = vset.pattern.permute.xlu0 0
      %669 = vperm.xlu0 %668, %v584
      %v670 = vpop.permute.xlu0 %669
      %671 = vset.pattern.permute.xlu0 0
      %672 = vperm.xlu0 %671, %v585
      %v673 = vpop.permute.xlu0 %672
      %674 = vset.pattern.permute.xlu0 0
      %675 = vperm.xlu0 %674, %v586
      %v676 = vpop.permute.xlu0 %675
      %677 = vset.pattern.permute.xlu0 0
      %678 = vperm.xlu0 %677, %v587
      %v679 = vpop.permute.xlu0 %678
      %680 = vset.pattern.permute.xlu0 0
      %681 = vperm.xlu0 %680, %v588
      %v682 = vpop.permute.xlu0 %681
      %683 = vset.pattern.permute.xlu0 0
      %684 = vperm.xlu0 %683, %v589
      %v685 = vpop.permute.xlu0 %684
      %vm686 = vcmp.eq.s32.totalorder %v557, %v592
      %vm687 = vcmp.eq.s32.totalorder %v557, %v595
      %vm688 = vcmp.eq.s32.totalorder %v557, %v598
      %vm689 = vcmp.eq.s32.totalorder %v557, %v601
      %vm690 = vcmp.eq.s32.totalorder %v557, %v604
      %vm691 = vcmp.eq.s32.totalorder %v557, %v607
      %vm692 = vcmp.eq.s32.totalorder %v557, %v610
      %vm693 = vcmp.eq.s32.totalorder %v557, %v613
      %vm694 = vcmp.eq.s32.totalorder %v557, %v616
      %vm695 = vcmp.eq.s32.totalorder %v557, %v619
      %vm696 = vcmp.eq.s32.totalorder %v557, %v622
      %vm697 = vcmp.eq.s32.totalorder %v557, %v625
      %vm698 = vcmp.eq.s32.totalorder %v557, %v628
      %vm699 = vcmp.eq.s32.totalorder %v557, %v631
      %vm700 = vcmp.eq.s32.totalorder %v557, %v634
      %vm701 = vcmp.eq.s32.totalorder %v557, %v637
      %vm702 = vcmp.eq.s32.totalorder %v557, %v640
      %vm703 = vcmp.eq.s32.totalorder %v557, %v643
      %vm704 = vcmp.eq.s32.totalorder %v557, %v646
      %vm705 = vcmp.eq.s32.totalorder %v557, %v649
      %vm706 = vcmp.eq.s32.totalorder %v557, %v652
      %vm707 = vcmp.eq.s32.totalorder %v557, %v655
      %vm708 = vcmp.eq.s32.totalorder %v557, %v658
      %vm709 = vcmp.eq.s32.totalorder %v557, %v661
      %vm710 = vcmp.eq.s32.totalorder %v557, %v664
      %vm711 = vcmp.eq.s32.totalorder %v557, %v667
      %vm712 = vcmp.eq.s32.totalorder %v557, %v670
      %vm713 = vcmp.eq.s32.totalorder %v557, %v673
      %vm714 = vcmp.eq.s32.totalorder %v557, %v676
      %vm715 = vcmp.eq.s32.totalorder %v557, %v679
      %vm716 = vcmp.eq.s32.totalorder %v557, %v682
      %vm717 = vcmp.eq.s32.totalorder %v557, %v685
      %v718 = vsel %vm686, 1.0, 0.0
      %v719 = vsel %vm687, 1.0, 0.0
      %v720 = vsel %vm688, 1.0, 0.0
      %v721 = vsel %vm689, 1.0, 0.0
      %v722 = vsel %vm690, 1.0, 0.0
      %v723 = vsel %vm691, 1.0, 0.0
      %v724 = vsel %vm692, 1.0, 0.0
      %v725 = vsel %vm693, 1.0, 0.0
      %v726 = vsel %vm694, 1.0, 0.0
      %v727 = vsel %vm695, 1.0, 0.0
      %v728 = vsel %vm696, 1.0, 0.0
      %v729 = vsel %vm697, 1.0, 0.0
      %v730 = vsel %vm698, 1.0, 0.0
      %v731 = vsel %vm699, 1.0, 0.0
      %v732 = vsel %vm700, 1.0, 0.0
      %v733 = vsel %vm701, 1.0, 0.0
      %v734 = vsel %vm702, 1.0, 0.0
      %v735 = vsel %vm703, 1.0, 0.0
      %v736 = vsel %vm704, 1.0, 0.0
      %v737 = vsel %vm705, 1.0, 0.0
      %v738 = vsel %vm706, 1.0, 0.0
      %v739 = vsel %vm707, 1.0, 0.0
      %v740 = vsel %vm708, 1.0, 0.0
      %v741 = vsel %vm709, 1.0, 0.0
      %v742 = vsel %vm710, 1.0, 0.0
      %v743 = vsel %vm711, 1.0, 0.0
      %v744 = vsel %vm712, 1.0, 0.0
      %v745 = vsel %vm713, 1.0, 0.0
      %v746 = vsel %vm714, 1.0, 0.0
      %v747 = vsel %vm715, 1.0, 0.0
      %v748 = vsel %vm716, 1.0, 0.0
      %v749 = vsel %vm717, 1.0, 0.0
      %v750 = vld [vmem:[%s1] sm:$0xff]
      %v751 = vld [vmem:[%s1 + $0x8] sm:$0xff]
      %v752 = vld [vmem:[%s1 + $0x10] sm:$0xff]
      %v753 = vld [vmem:[%s1 + $0x18] sm:$0xff]
      %v754 = vld [vmem:[%s1 + $0x20] sm:$0xff]
      %v755 = vld [vmem:[%s1 + $0x28] sm:$0xff]
      %v756 = vld [vmem:[%s1 + $0x30] sm:$0xff]
      %v757 = vld [vmem:[%s1 + $0x38] sm:$0xff]
      %v758 = vld [vmem:[%s1 + $0x40] sm:$0xff]
      %v759 = vld [vmem:[%s1 + $0x48] sm:$0xff]
      %v760 = vld [vmem:[%s1 + $0x50] sm:$0xff]
      %v761 = vld [vmem:[%s1 + $0x58] sm:$0xff]
      %v762 = vld [vmem:[%s1 + $0x60] sm:$0xff]
      %v763 = vld [vmem:[%s1 + $0x68] sm:$0xff]
      %v764 = vld [vmem:[%s1 + $0x70] sm:$0xff]
      %v765 = vld [vmem:[%s1 + $0x78] sm:$0xff]
      %v766 = vld [vmem:[%s1 + $0x80] sm:$0xff]
      %v767 = vld [vmem:[%s1 + $0x88] sm:$0xff]
      %v768 = vld [vmem:[%s1 + $0x90] sm:$0xff]
      %v769 = vld [vmem:[%s1 + $0x98] sm:$0xff]
      %v770 = vld [vmem:[%s1 + $0xa0] sm:$0xff]
      %v771 = vld [vmem:[%s1 + $0xa8] sm:$0xff]
      %v772 = vld [vmem:[%s1 + $0xb0] sm:$0xff]
      %v773 = vld [vmem:[%s1 + $0xb8] sm:$0xff]
      %v774 = vld [vmem:[%s1 + $0xc0] sm:$0xff]
      %v775 = vld [vmem:[%s1 + $0xc8] sm:$0xff]
      %v776 = vld [vmem:[%s1 + $0xd0] sm:$0xff]
      %v777 = vld [vmem:[%s1 + $0xd8] sm:$0xff]
      %v778 = vld [vmem:[%s1 + $0xe0] sm:$0xff]
      %v779 = vld [vmem:[%s1 + $0xe8] sm:$0xff]
      %v780 = vld [vmem:[%s1 + $0xf0] sm:$0xff]
      %v781 = vld [vmem:[%s1 + $0xf8] sm:$0xff]
      %782 = vset.pattern.permute.xlu0 0
      %783 = vperm.xlu0 %782, %v750
      %v784 = vpop.permute.xlu0 %783
      %785 = vset.pattern.permute.xlu0 0
      %786 = vperm.xlu0 %785, %v751
      %v787 = vpop.permute.xlu0 %786
      %788 = vset.pattern.permute.xlu0 0
      %789 = vperm.xlu0 %788, %v752
      %v790 = vpop.permute.xlu0 %789
      %791 = vset.pattern.permute.xlu0 0
      %792 = vperm.xlu0 %791, %v753
      %v793 = vpop.permute.xlu0 %792
      %794 = vset.pattern.permute.xlu0 0
      %795 = vperm.xlu0 %794, %v754
      %v796 = vpop.permute.xlu0 %795
      %797 = vset.pattern.permute.xlu0 0
      %798 = vperm.xlu0 %797, %v755
      %v799 = vpop.permute.xlu0 %798
      %800 = vset.pattern.permute.xlu0 0
      %801 = vperm.xlu0 %800, %v756
      %v802 = vpop.permute.xlu0 %801
      %803 = vset.pattern.permute.xlu0 0
      %804 = vperm.xlu0 %803, %v757
      %v805 = vpop.permute.xlu0 %804
      %806 = vset.pattern.permute.xlu0 0
      %807 = vperm.xlu0 %806, %v758
      %v808 = vpop.permute.xlu0 %807
      %809 = vset.pattern.permute.xlu0 0
      %810 = vperm.xlu0 %809, %v759
      %v811 = vpop.permute.xlu0 %810
      %812 = vset.pattern.permute.xlu0 0
      %813 = vperm.xlu0 %812, %v760
      %v814 = vpop.permute.xlu0 %813
      %815 = vset.pattern.permute.xlu0 0
      %816 = vperm.xlu0 %815, %v761
      %v817 = vpop.permute.xlu0 %816
      %818 = vset.pattern.permute.xlu0 0
      %819 = vperm.xlu0 %818, %v762
      %v820 = vpop.permute.xlu0 %819
      %821 = vset.pattern.permute.xlu0 0
      %822 = vperm.xlu0 %821, %v763
      %v823 = vpop.permute.xlu0 %822
      %824 = vset.pattern.permute.xlu0 0
      %825 = vperm.xlu0 %824, %v764
      %v826 = vpop.permute.xlu0 %825
      %827 = vset.pattern.permute.xlu0 0
      %828 = vperm.xlu0 %827, %v765
      %v829 = vpop.permute.xlu0 %828
      %830 = vset.pattern.permute.xlu0 0
      %831 = vperm.xlu0 %830, %v766
      %v832 = vpop.permute.xlu0 %831
      %833 = vset.pattern.permute.xlu0 0
      %834 = vperm.xlu0 %833, %v767
      %v835 = vpop.permute.xlu0 %834
      %836 = vset.pattern.permute.xlu0 0
      %837 = vperm.xlu0 %836, %v768
      %v838 = vpop.permute.xlu0 %837
      %839 = vset.pattern.permute.xlu0 0
      %840 = vperm.xlu0 %839, %v769
      %v841 = vpop.permute.xlu0 %840
      %842 = vset.pattern.permute.xlu0 0
      %843 = vperm.xlu0 %842, %v770
      %v844 = vpop.permute.xlu0 %843
      %845 = vset.pattern.permute.xlu0 0
      %846 = vperm.xlu0 %845, %v771
      %v847 = vpop.permute.xlu0 %846
      %848 = vset.pattern.permute.xlu0 0
      %849 = vperm.xlu0 %848, %v772
      %v850 = vpop.permute.xlu0 %849
      %851 = vset.pattern.permute.xlu0 0
      %852 = vperm.xlu0 %851, %v773
      %v853 = vpop.permute.xlu0 %852
      %854 = vset.pattern.permute.xlu0 0
      %855 = vperm.xlu0 %854, %v774
      %v856 = vpop.permute.xlu0 %855
      %857 = vset.pattern.permute.xlu0 0
      %858 = vperm.xlu0 %857, %v775
      %v859 = vpop.permute.xlu0 %858
      %860 = vset.pattern.permute.xlu0 0
      %861 = vperm.xlu0 %860, %v776
      %v862 = vpop.permute.xlu0 %861
      %863 = vset.pattern.permute.xlu0 0
      %864 = vperm.xlu0 %863, %v777
      %v865 = vpop.permute.xlu0 %864
      %866 = vset.pattern.permute.xlu0 0
      %867 = vperm.xlu0 %866, %v778
      %v868 = vpop.permute.xlu0 %867
      %869 = vset.pattern.permute.xlu0 0
      %870 = vperm.xlu0 %869, %v779
      %v871 = vpop.permute.xlu0 %870
      %872 = vset.pattern.permute.xlu0 0
      %873 = vperm.xlu0 %872, %v780
      %v874 = vpop.permute.xlu0 %873
      %875 = vset.pattern.permute.xlu0 0
      %876 = vperm.xlu0 %875, %v781
      %v877 = vpop.permute.xlu0 %876
      %vm878 = vcmp.eq.s32.totalorder %v557, %v784
      %vm879 = vcmp.eq.s32.totalorder %v557, %v787
      %vm880 = vcmp.eq.s32.totalorder %v557, %v790
      %vm881 = vcmp.eq.s32.totalorder %v557, %v793
      %vm882 = vcmp.eq.s32.totalorder %v557, %v796
      %vm883 = vcmp.eq.s32.totalorder %v557, %v799
      %vm884 = vcmp.eq.s32.totalorder %v557, %v802
      %vm885 = vcmp.eq.s32.totalorder %v557, %v805
      %vm886 = vcmp.eq.s32.totalorder %v557, %v808
      %vm887 = vcmp.eq.s32.totalorder %v557, %v811
      %vm888 = vcmp.eq.s32.totalorder %v557, %v814
      %vm889 = vcmp.eq.s32.totalorder %v557, %v817
      %vm890 = vcmp.eq.s32.totalorder %v557, %v820
      %vm891 = vcmp.eq.s32.totalorder %v557, %v823
      %vm892 = vcmp.eq.s32.totalorder %v557, %v826
      %vm893 = vcmp.eq.s32.totalorder %v557, %v829
      %vm894 = vcmp.eq.s32.totalorder %v557, %v832
      %vm895 = vcmp.eq.s32.totalorder %v557, %v835
      %vm896 = vcmp.eq.s32.totalorder %v557, %v838
      %vm897 = vcmp.eq.s32.totalorder %v557, %v841
      %vm898 = vcmp.eq.s32.totalorder %v557, %v844
      %vm899 = vcmp.eq.s32.totalorder %v557, %v847
      %vm900 = vcmp.eq.s32.totalorder %v557, %v850
      %vm901 = vcmp.eq.s32.totalorder %v557, %v853
      %vm902 = vcmp.eq.s32.totalorder %v557, %v856
      %vm903 = vcmp.eq.s32.totalorder %v557, %v859
      %vm904 = vcmp.eq.s32.totalorder %v557, %v862
      %vm905 = vcmp.eq.s32.totalorder %v557, %v865
      %vm906 = vcmp.eq.s32.totalorder %v557, %v868
      %vm907 = vcmp.eq.s32.totalorder %v557, %v871
      %vm908 = vcmp.eq.s32.totalorder %v557, %v874
      %vm909 = vcmp.eq.s32.totalorder %v557, %v877
      %v910 = vsel %vm878, 1.0, 0.0
      %v911 = vsel %vm879, 1.0, 0.0
      %v912 = vsel %vm880, 1.0, 0.0
      %v913 = vsel %vm881, 1.0, 0.0
      %v914 = vsel %vm882, 1.0, 0.0
      %v915 = vsel %vm883, 1.0, 0.0
      %v916 = vsel %vm884, 1.0, 0.0
      %v917 = vsel %vm885, 1.0, 0.0
      %v918 = vsel %vm886, 1.0, 0.0
      %v919 = vsel %vm887, 1.0, 0.0
      %v920 = vsel %vm888, 1.0, 0.0
      %v921 = vsel %vm889, 1.0, 0.0
      %v922 = vsel %vm890, 1.0, 0.0
      %v923 = vsel %vm891, 1.0, 0.0
      %v924 = vsel %vm892, 1.0, 0.0
      %v925 = vsel %vm893, 1.0, 0.0
      %v926 = vsel %vm894, 1.0, 0.0
      %v927 = vsel %vm895, 1.0, 0.0
      %v928 = vsel %vm896, 1.0, 0.0
      %v929 = vsel %vm897, 1.0, 0.0
      %v930 = vsel %vm898, 1.0, 0.0
      %v931 = vsel %vm899, 1.0, 0.0
      %v932 = vsel %vm900, 1.0, 0.0
      %v933 = vsel %vm901, 1.0, 0.0
      %v934 = vsel %vm902, 1.0, 0.0
      %v935 = vsel %vm903, 1.0, 0.0
      %v936 = vsel %vm904, 1.0, 0.0
      %v937 = vsel %vm905, 1.0, 0.0
      %v938 = vsel %vm906, 1.0, 0.0
      %v939 = vsel %vm907, 1.0, 0.0
      %v940 = vsel %vm908, 1.0, 0.0
      %v941 = vsel %vm909, 1.0, 0.0
      %vm942 = vcmask 523264
      %v944 = vsel %vm942, %v910, 0
      %v947 = vsel %vm942, %v911, 0
      %v950 = vsel %vm942, %v912, 0
      %v953 = vsel %vm942, %v913, 0
      %v956 = vsel %vm942, %v914, 0
      %v959 = vsel %vm942, %v915, 0
      %v962 = vsel %vm942, %v916, 0
      %v965 = vsel %vm942, %v917, 0
      %v968 = vsel %vm942, %v918, 0
      %v971 = vsel %vm942, %v919, 0
      %v974 = vsel %vm942, %v920, 0
      %v977 = vsel %vm942, %v921, 0
      %v980 = vsel %vm942, %v922, 0
      %v983 = vsel %vm942, %v923, 0
      %v986 = vsel %vm942, %v924, 0
      %v989 = vsel %vm942, %v925, 0
      %v992 = vsel %vm942, %v926, 0
      %v995 = vsel %vm942, %v927, 0
      %v998 = vsel %vm942, %v928, 0
      %v1001 = vsel %vm942, %v929, 0
      %v1004 = vsel %vm942, %v930, 0
      %v1007 = vsel %vm942, %v931, 0
      %v1010 = vsel %vm942, %v932, 0
      %v1013 = vsel %vm942, %v933, 0
      %v1016 = vsel %vm942, %v934, 0
      %v1019 = vsel %vm942, %v935, 0
      %v1022 = vsel %vm942, %v936, 0
      %v1025 = vsel %vm942, %v937, 0
      %v1028 = vsel %vm942, %v938, 0
      %v1031 = vsel %vm942, %v939, 0
      %v1034 = vsel %vm942, %v940, 0
      %v1037 = vsel %vm942, %v941, 0
      %1039 = vmatpush.msra.mxu0 0.0
      %1040 = vmatpush.msra.mxu0 0.0
      %1041 = vmatpush.msra.mxu0 0.0
      %1042 = vmatpush.msra.mxu0 0.0
      %1043 = vmatpush.msra.mxu0 0.0
      %1044 = vmatpush.msra.mxu0 0.0
      %1045 = vmatpush.msra.mxu0 0.0
      %1046 = vmatpush.msra.mxu0 0.0
      %1047 = vmatpush.msra.mxu0 %v554
      %1048 = vmatpush.msra.mxu0 %v551
      %1049 = vmatpush.msra.mxu0 %v548
      %1050 = vmatpush.msra.mxu0 %v545
      %1051 = vmatpush.msra.mxu0 %v542
      %1052 = vmatpush.msra.mxu0 %v539
      %1053 = vmatpush.msra.mxu0 %v536
      %1054 = vmatpush.msra.mxu0 %v533
      %1055 = vmatmul.f32.gmra.mxu0 %v944
      %v1056 = vpop.f32.mrf.mxu0
      %v1057 = vadd.f32 0.0, %v1056
      %1058 = vmatmul.f32.gmra.mxu0 %v947
      %v1059 = vpop.f32.mrf.mxu0
      %v1060 = vadd.f32 0.0, %v1059
      %1061 = vmatmul.f32.gmra.mxu0 %v950
      %v1062 = vpop.f32.mrf.mxu0
      %v1063 = vadd.f32 0.0, %v1062
      %1064 = vmatmul.f32.gmra.mxu0 %v953
      %v1065 = vpop.f32.mrf.mxu0
      %v1066 = vadd.f32 0.0, %v1065
      %1067 = vmatmul.f32.gmra.mxu0 %v956
      %v1068 = vpop.f32.mrf.mxu0
      %v1069 = vadd.f32 0.0, %v1068
      %1070 = vmatmul.f32.gmra.mxu0 %v959
      %v1071 = vpop.f32.mrf.mxu0
      %v1072 = vadd.f32 0.0, %v1071
      %1073 = vmatmul.f32.gmra.mxu0 %v962
      %v1074 = vpop.f32.mrf.mxu0
      %v1075 = vadd.f32 0.0, %v1074
      %1076 = vmatmul.f32.gmra.mxu0 %v965
      %v1077 = vpop.f32.mrf.mxu0
      %v1078 = vadd.f32 0.0, %v1077
      %1079 = vmatmul.f32.gmra.mxu0 %v968
      %v1080 = vpop.f32.mrf.mxu0
      %v1081 = vadd.f32 0.0, %v1080
      %1082 = vmatmul.f32.gmra.mxu0 %v971
      %v1083 = vpop.f32.mrf.mxu0
      %v1084 = vadd.f32 0.0, %v1083
      %1085 = vmatmul.f32.gmra.mxu0 %v974
      %v1086 = vpop.f32.mrf.mxu0
      %v1087 = vadd.f32 0.0, %v1086
      %1088 = vmatmul.f32.gmra.mxu0 %v977
      %v1089 = vpop.f32.mrf.mxu0
      %v1090 = vadd.f32 0.0, %v1089
      %1091 = vmatmul.f32.gmra.mxu0 %v980
      %v1092 = vpop.f32.mrf.mxu0
      %v1093 = vadd.f32 0.0, %v1092
      %1094 = vmatmul.f32.gmra.mxu0 %v983
      %v1095 = vpop.f32.mrf.mxu0
      %v1096 = vadd.f32 0.0, %v1095
      %1097 = vmatmul.f32.gmra.mxu0 %v986
      %v1098 = vpop.f32.mrf.mxu0
      %v1099 = vadd.f32 0.0, %v1098
      %1100 = vmatmul.f32.gmra.mxu0 %v989
      %v1101 = vpop.f32.mrf.mxu0
      %v1102 = vadd.f32 0.0, %v1101
      %1103 = vmatmul.f32.gmra.mxu0 %v992
      %v1104 = vpop.f32.mrf.mxu0
      %v1105 = vadd.f32 0.0, %v1104
      %1106 = vmatmul.f32.gmra.mxu0 %v995
      %v1107 = vpop.f32.mrf.mxu0
      %v1108 = vadd.f32 0.0, %v1107
      %1109 = vmatmul.f32.gmra.mxu0 %v998
      %v1110 = vpop.f32.mrf.mxu0
      %v1111 = vadd.f32 0.0, %v1110
      %1112 = vmatmul.f32.gmra.mxu0 %v1001
      %v1113 = vpop.f32.mrf.mxu0
      %v1114 = vadd.f32 0.0, %v1113
      %1115 = vmatmul.f32.gmra.mxu0 %v1004
      %v1116 = vpop.f32.mrf.mxu0
      %v1117 = vadd.f32 0.0, %v1116
      %1118 = vmatmul.f32.gmra.mxu0 %v1007
      %v1119 = vpop.f32.mrf.mxu0
      %v1120 = vadd.f32 0.0, %v1119
      %1121 = vmatmul.f32.gmra.mxu0 %v1010
      %v1122 = vpop.f32.mrf.mxu0
      %v1123 = vadd.f32 0.0, %v1122
      %1124 = vmatmul.f32.gmra.mxu0 %v1013
      %v1125 = vpop.f32.mrf.mxu0
      %v1126 = vadd.f32 0.0, %v1125
      %1127 = vmatmul.f32.gmra.mxu0 %v1016
      %v1128 = vpop.f32.mrf.mxu0
      %v1129 = vadd.f32 0.0, %v1128
      %1130 = vmatmul.f32.gmra.mxu0 %v1019
      %v1131 = vpop.f32.mrf.mxu0
      %v1132 = vadd.f32 0.0, %v1131
      %1133 = vmatmul.f32.gmra.mxu0 %v1022
      %v1134 = vpop.f32.mrf.mxu0
      %v1135 = vadd.f32 0.0, %v1134
      %1136 = vmatmul.f32.gmra.mxu0 %v1025
      %v1137 = vpop.f32.mrf.mxu0
      %v1138 = vadd.f32 0.0, %v1137
      %1139 = vmatmul.f32.gmra.mxu0 %v1028
      %v1140 = vpop.f32.mrf.mxu0
      %v1141 = vadd.f32 0.0, %v1140
      %1142 = vmatmul.f32.gmra.mxu0 %v1031
      %v1143 = vpop.f32.mrf.mxu0
      %v1144 = vadd.f32 0.0, %v1143
      %1145 = vmatmul.f32.gmra.mxu0 %v1034
      %v1146 = vpop.f32.mrf.mxu0
      %v1147 = vadd.f32 0.0, %v1146
      %1148 = vmatmul.f32.gmra.mxu0 %v1037
      %v1149 = vpop.f32.mrf.mxu0
      %v1150 = vadd.f32 0.0, %v1149
      %1151 = vdwg.mxu0
      %v1153 = vsel %vm942, %v718, 0
      %v1156 = vsel %vm942, %v719, 0
      %v1159 = vsel %vm942, %v720, 0
      %v1162 = vsel %vm942, %v721, 0
      %v1165 = vsel %vm942, %v722, 0
      %v1168 = vsel %vm942, %v723, 0
      %v1171 = vsel %vm942, %v724, 0
      %v1174 = vsel %vm942, %v725, 0
      %v1177 = vsel %vm942, %v726, 0
      %v1180 = vsel %vm942, %v727, 0
      %v1183 = vsel %vm942, %v728, 0
      %v1186 = vsel %vm942, %v729, 0
      %v1189 = vsel %vm942, %v730, 0
      %v1192 = vsel %vm942, %v731, 0
      %v1195 = vsel %vm942, %v732, 0
      %v1198 = vsel %vm942, %v733, 0
      %v1201 = vsel %vm942, %v734, 0
      %v1204 = vsel %vm942, %v735, 0
      %v1207 = vsel %vm942, %v736, 0
      %v1210 = vsel %vm942, %v737, 0
      %v1213 = vsel %vm942, %v738, 0
      %v1216 = vsel %vm942, %v739, 0
      %v1219 = vsel %vm942, %v740, 0
      %v1222 = vsel %vm942, %v741, 0
      %v1225 = vsel %vm942, %v742, 0
      %v1228 = vsel %vm942, %v743, 0
      %v1231 = vsel %vm942, %v744, 0
      %v1234 = vsel %vm942, %v745, 0
      %v1237 = vsel %vm942, %v746, 0
      %v1240 = vsel %vm942, %v747, 0
      %v1243 = vsel %vm942, %v748, 0
      %v1246 = vsel %vm942, %v749, 0
      %1248 = vmatpush.msra.mxu0 0.0
      %1249 = vmatpush.msra.mxu0 0.0
      %1250 = vmatpush.msra.mxu0 0.0
      %1251 = vmatpush.msra.mxu0 0.0
      %1252 = vmatpush.msra.mxu0 0.0
      %1253 = vmatpush.msra.mxu0 0.0
      %1254 = vmatpush.msra.mxu0 0.0
      %1255 = vmatpush.msra.mxu0 0.0
      %1256 = vmatpush.msra.mxu0 %v509
      %1257 = vmatpush.msra.mxu0 %v506
      %1258 = vmatpush.msra.mxu0 %v503
      %1259 = vmatpush.msra.mxu0 %v500
      %1260 = vmatpush.msra.mxu0 %v497
      %1261 = vmatpush.msra.mxu0 %v494
      %1262 = vmatpush.msra.mxu0 %v491
      %1263 = vmatpush.msra.mxu0 %v488
      %1264 = vmatmul.f32.gmra.mxu0 %v1153
      %v1265 = vpop.f32.mrf.mxu0
      %v1266 = vadd.f32 %v1057, %v1265
      %1267 = vmatmul.f32.gmra.mxu0 %v1156
      %v1268 = vpop.f32.mrf.mxu0
      %v1269 = vadd.f32 %v1060, %v1268
      %1270 = vmatmul.f32.gmra.mxu0 %v1159
      %v1271 = vpop.f32.mrf.mxu0
      %v1272 = vadd.f32 %v1063, %v1271
      %1273 = vmatmul.f32.gmra.mxu0 %v1162
      %v1274 = vpop.f32.mrf.mxu0
      %v1275 = vadd.f32 %v1066, %v1274
      %1276 = vmatmul.f32.gmra.mxu0 %v1165
      %v1277 = vpop.f32.mrf.mxu0
      %v1278 = vadd.f32 %v1069, %v1277
      %1279 = vmatmul.f32.gmra.mxu0 %v1168
      %v1280 = vpop.f32.mrf.mxu0
      %v1281 = vadd.f32 %v1072, %v1280
      %1282 = vmatmul.f32.gmra.mxu0 %v1171
      %v1283 = vpop.f32.mrf.mxu0
      %v1284 = vadd.f32 %v1075, %v1283
      %1285 = vmatmul.f32.gmra.mxu0 %v1174
      %v1286 = vpop.f32.mrf.mxu0
      %v1287 = vadd.f32 %v1078, %v1286
      %1288 = vmatmul.f32.gmra.mxu0 %v1177
      %v1289 = vpop.f32.mrf.mxu0
      %v1290 = vadd.f32 %v1081, %v1289
      %1291 = vmatmul.f32.gmra.mxu0 %v1180
      %v1292 = vpop.f32.mrf.mxu0
      %v1293 = vadd.f32 %v1084, %v1292
      %1294 = vmatmul.f32.gmra.mxu0 %v1183
      %v1295 = vpop.f32.mrf.mxu0
      %v1296 = vadd.f32 %v1087, %v1295
      %1297 = vmatmul.f32.gmra.mxu0 %v1186
      %v1298 = vpop.f32.mrf.mxu0
      %v1299 = vadd.f32 %v1090, %v1298
      %1300 = vmatmul.f32.gmra.mxu0 %v1189
      %v1301 = vpop.f32.mrf.mxu0
      %v1302 = vadd.f32 %v1093, %v1301
      %1303 = vmatmul.f32.gmra.mxu0 %v1192
      %v1304 = vpop.f32.mrf.mxu0
      %v1305 = vadd.f32 %v1096, %v1304
      %1306 = vmatmul.f32.gmra.mxu0 %v1195
      %v1307 = vpop.f32.mrf.mxu0
      %v1308 = vadd.f32 %v1099, %v1307
      %1309 = vmatmul.f32.gmra.mxu0 %v1198
      %v1310 = vpop.f32.mrf.mxu0
      %v1311 = vadd.f32 %v1102, %v1310
      %1312 = vmatmul.f32.gmra.mxu0 %v1201
      %v1313 = vpop.f32.mrf.mxu0
      %v1314 = vadd.f32 %v1105, %v1313
      %1315 = vmatmul.f32.gmra.mxu0 %v1204
      %v1316 = vpop.f32.mrf.mxu0
      %v1317 = vadd.f32 %v1108, %v1316
      %1318 = vmatmul.f32.gmra.mxu0 %v1207
      %v1319 = vpop.f32.mrf.mxu0
      %v1320 = vadd.f32 %v1111, %v1319
      %1321 = vmatmul.f32.gmra.mxu0 %v1210
      %v1322 = vpop.f32.mrf.mxu0
      %v1323 = vadd.f32 %v1114, %v1322
      %1324 = vmatmul.f32.gmra.mxu0 %v1213
      %v1325 = vpop.f32.mrf.mxu0
      %v1326 = vadd.f32 %v1117, %v1325
      %1327 = vmatmul.f32.gmra.mxu0 %v1216
      %v1328 = vpop.f32.mrf.mxu0
      %v1329 = vadd.f32 %v1120, %v1328
      %1330 = vmatmul.f32.gmra.mxu0 %v1219
      %v1331 = vpop.f32.mrf.mxu0
      %v1332 = vadd.f32 %v1123, %v1331
      %1333 = vmatmul.f32.gmra.mxu0 %v1222
      %v1334 = vpop.f32.mrf.mxu0
      %v1335 = vadd.f32 %v1126, %v1334
      %1336 = vmatmul.f32.gmra.mxu0 %v1225
      %v1337 = vpop.f32.mrf.mxu0
      %v1338 = vadd.f32 %v1129, %v1337
      %1339 = vmatmul.f32.gmra.mxu0 %v1228
      %v1340 = vpop.f32.mrf.mxu0
      %v1341 = vadd.f32 %v1132, %v1340
      %1342 = vmatmul.f32.gmra.mxu0 %v1231
      %v1343 = vpop.f32.mrf.mxu0
      %v1344 = vadd.f32 %v1135, %v1343
      %1345 = vmatmul.f32.gmra.mxu0 %v1234
      %v1346 = vpop.f32.mrf.mxu0
      %v1347 = vadd.f32 %v1138, %v1346
      %1348 = vmatmul.f32.gmra.mxu0 %v1237
      %v1349 = vpop.f32.mrf.mxu0
      %v1350 = vadd.f32 %v1141, %v1349
      %1351 = vmatmul.f32.gmra.mxu0 %v1240
      %v1352 = vpop.f32.mrf.mxu0
      %v1353 = vadd.f32 %v1144, %v1352
      %1354 = vmatmul.f32.gmra.mxu0 %v1243
      %v1355 = vpop.f32.mrf.mxu0
      %v1356 = vadd.f32 %v1147, %v1355
      %1357 = vmatmul.f32.gmra.mxu0 %v1246
      %v1358 = vpop.f32.mrf.mxu0
      %v1359 = vadd.f32 %v1150, %v1358
      %1360 = vdwg.mxu0
      %v1361 = vld [vmem:[%s6] sm:$0x1]
      %v1363 = vperm.slane %v1361, 0
      %v1365 = vadd.f32 %v1266, %v1363
      %v1366 = vadd.f32 %v1269, %v1363
      %v1367 = vadd.f32 %v1272, %v1363
      %v1368 = vadd.f32 %v1275, %v1363
      %v1369 = vadd.f32 %v1278, %v1363
      %v1370 = vadd.f32 %v1281, %v1363
      %v1371 = vadd.f32 %v1284, %v1363
      %v1372 = vadd.f32 %v1287, %v1363
      %v1373 = vadd.f32 %v1290, %v1363
      %v1374 = vadd.f32 %v1293, %v1363
      %v1375 = vadd.f32 %v1296, %v1363
      %v1376 = vadd.f32 %v1299, %v1363
      %v1377 = vadd.f32 %v1302, %v1363
      %v1378 = vadd.f32 %v1305, %v1363
      %v1379 = vadd.f32 %v1308, %v1363
      %v1380 = vadd.f32 %v1311, %v1363
      %v1381 = vadd.f32 %v1314, %v1363
      %v1382 = vadd.f32 %v1317, %v1363
      %v1383 = vadd.f32 %v1320, %v1363
      %v1384 = vadd.f32 %v1323, %v1363
      %v1385 = vadd.f32 %v1326, %v1363
      %v1386 = vadd.f32 %v1329, %v1363
      %v1387 = vadd.f32 %v1332, %v1363
      %v1388 = vadd.f32 %v1335, %v1363
      %v1389 = vadd.f32 %v1338, %v1363
      %v1390 = vadd.f32 %v1341, %v1363
      %v1391 = vadd.f32 %v1344, %v1363
      %v1392 = vadd.f32 %v1347, %v1363
      %v1393 = vadd.f32 %v1350, %v1363
      %v1394 = vadd.f32 %v1353, %v1363
      %v1395 = vadd.f32 %v1356, %v1363
      %v1396 = vadd.f32 %v1359, %v1363
      %v1397 = vmax.f32 %v1365, 0.0
      %v1398 = vmax.f32 %v1366, 0.0
      %v1399 = vmax.f32 %v1367, 0.0
      %v1400 = vmax.f32 %v1368, 0.0
      %v1401 = vmax.f32 %v1369, 0.0
      %v1402 = vmax.f32 %v1370, 0.0
      %v1403 = vmax.f32 %v1371, 0.0
      %v1404 = vmax.f32 %v1372, 0.0
      %v1405 = vmax.f32 %v1373, 0.0
      %v1406 = vmax.f32 %v1374, 0.0
      %v1407 = vmax.f32 %v1375, 0.0
      %v1408 = vmax.f32 %v1376, 0.0
      %v1409 = vmax.f32 %v1377, 0.0
      %v1410 = vmax.f32 %v1378, 0.0
      %v1411 = vmax.f32 %v1379, 0.0
      %v1412 = vmax.f32 %v1380, 0.0
      %v1413 = vmax.f32 %v1381, 0.0
      %v1414 = vmax.f32 %v1382, 0.0
      %v1415 = vmax.f32 %v1383, 0.0
      %v1416 = vmax.f32 %v1384, 0.0
      %v1417 = vmax.f32 %v1385, 0.0
      %v1418 = vmax.f32 %v1386, 0.0
      %v1419 = vmax.f32 %v1387, 0.0
      %v1420 = vmax.f32 %v1388, 0.0
      %v1421 = vmax.f32 %v1389, 0.0
      %v1422 = vmax.f32 %v1390, 0.0
      %v1423 = vmax.f32 %v1391, 0.0
      %v1424 = vmax.f32 %v1392, 0.0
      %v1425 = vmax.f32 %v1393, 0.0
      %v1426 = vmax.f32 %v1394, 0.0
      %v1427 = vmax.f32 %v1395, 0.0
      %v1428 = vmax.f32 %v1396, 0.0
      %v1429 = vlaneseq
      %v1430 = vshrl.u32 %v1429, 7
      %v1431 = vadd.s32 %v1430, 8
      %v1432 = vadd.s32 %v1430, 16
      %v1433 = vadd.s32 %v1430, 24
      %v1434 = vadd.s32 %v1430, 32
      %v1435 = vadd.s32 %v1430, 40
      %v1436 = vadd.s32 %v1430, 48
      %v1437 = vadd.s32 %v1430, 56
      %v1438 = vld [vmem:[%s2] sm:$0x3]
      %v1439 = vperm.slane %v1438, 0
      %v1440 = vperm.slane %v1438, 1
      %vm1441 = vcmp.eq.s32.totalorder %v1430, %v1439
      %vm1442 = vcmp.eq.s32.totalorder %v1430, %v1440
      %vm1443 = vcmp.eq.s32.totalorder %v1431, %v1439
      %vm1444 = vcmp.eq.s32.totalorder %v1431, %v1440
      %vm1445 = vcmp.eq.s32.totalorder %v1432, %v1439
      %vm1446 = vcmp.eq.s32.totalorder %v1432, %v1440
      %vm1447 = vcmp.eq.s32.totalorder %v1433, %v1439
      %vm1448 = vcmp.eq.s32.totalorder %v1433, %v1440
      %vm1449 = vcmp.eq.s32.totalorder %v1434, %v1439
      %vm1450 = vcmp.eq.s32.totalorder %v1434, %v1440
      %vm1451 = vcmp.eq.s32.totalorder %v1435, %v1439
      %vm1452 = vcmp.eq.s32.totalorder %v1435, %v1440
      %vm1453 = vcmp.eq.s32.totalorder %v1436, %v1439
      %vm1454 = vcmp.eq.s32.totalorder %v1436, %v1440
      %vm1455 = vcmp.eq.s32.totalorder %v1437, %v1439
      %vm1456 = vcmp.eq.s32.totalorder %v1437, %v1440
      %v1457 = vsel %vm1441, 1.0, 0.0
      %v1458 = vsel %vm1442, 1.0, 0.0
      %v1459 = vsel %vm1443, 1.0, 0.0
      %v1460 = vsel %vm1444, 1.0, 0.0
      %v1461 = vsel %vm1445, 1.0, 0.0
      %v1462 = vsel %vm1446, 1.0, 0.0
      %v1463 = vsel %vm1447, 1.0, 0.0
      %v1464 = vsel %vm1448, 1.0, 0.0
      %v1465 = vsel %vm1449, 1.0, 0.0
      %v1466 = vsel %vm1450, 1.0, 0.0
      %v1467 = vsel %vm1451, 1.0, 0.0
      %v1468 = vsel %vm1452, 1.0, 0.0
      %v1469 = vsel %vm1453, 1.0, 0.0
      %v1470 = vsel %vm1454, 1.0, 0.0
      %v1471 = vsel %vm1455, 1.0, 0.0
      %v1472 = vsel %vm1456, 1.0, 0.0
      %1473 = vmatpush.msra.mxu0 %v1412
      %1474 = vmatpush.msra.mxu0 %v1411
      %1475 = vmatpush.msra.mxu0 %v1410
      %1476 = vmatpush.msra.mxu0 %v1409
      %1477 = vmatpush.msra.mxu0 %v1408
      %1478 = vmatpush.msra.mxu0 %v1407
      %1479 = vmatpush.msra.mxu0 %v1406
      %1480 = vmatpush.msra.mxu0 %v1405
      %1481 = vmatpush.msra.mxu0 %v1404
      %1482 = vmatpush.msra.mxu0 %v1403
      %1483 = vmatpush.msra.mxu0 %v1402
      %1484 = vmatpush.msra.mxu0 %v1401
      %1485 = vmatpush.msra.mxu0 %v1400
      %1486 = vmatpush.msra.mxu0 %v1399
      %1487 = vmatpush.msra.mxu0 %v1398
      %1488 = vmatpush.msra.mxu0 %v1397
      %1489 = vmatmul.f32.gmra.mxu0 %v1457
      %v1490 = vpop.f32.mrf.mxu0
      %v1491 = vadd.f32 0.0, %v1490
      %1492 = vmatmul.f32.gmra.mxu0 %v1459
      %v1493 = vpop.f32.mrf.mxu0
      %v1494 = vadd.f32 0.0, %v1493
      %1495 = vmatmul.f32.gmra.mxu0 %v1461
      %v1496 = vpop.f32.mrf.mxu0
      %v1497 = vadd.f32 0.0, %v1496
      %1498 = vmatmul.f32.gmra.mxu0 %v1463
      %v1499 = vpop.f32.mrf.mxu0
      %v1500 = vadd.f32 0.0, %v1499
      %1501 = vmatmul.f32.gmra.mxu0 %v1465
      %v1502 = vpop.f32.mrf.mxu0
      %v1503 = vadd.f32 0.0, %v1502
      %1504 = vmatmul.f32.gmra.mxu0 %v1467
      %v1505 = vpop.f32.mrf.mxu0
      %v1506 = vadd.f32 0.0, %v1505
      %1507 = vmatmul.f32.gmra.mxu0 %v1469
      %v1508 = vpop.f32.mrf.mxu0
      %v1509 = vadd.f32 0.0, %v1508
      %1510 = vmatmul.f32.gmra.mxu0 %v1471
      %v1511 = vpop.f32.mrf.mxu0
      %v1512 = vadd.f32 0.0, %v1511
      %1513 = vdwg.mxu0
      %1514 = vmatpush.msra.mxu0 %v1428
      %1515 = vmatpush.msra.mxu0 %v1427
      %1516 = vmatpush.msra.mxu0 %v1426
      %1517 = vmatpush.msra.mxu0 %v1425
      %1518 = vmatpush.msra.mxu0 %v1424
      %1519 = vmatpush.msra.mxu0 %v1423
      %1520 = vmatpush.msra.mxu0 %v1422
      %1521 = vmatpush.msra.mxu0 %v1421
      %1522 = vmatpush.msra.mxu0 %v1420
      %1523 = vmatpush.msra.mxu0 %v1419
      %1524 = vmatpush.msra.mxu0 %v1418
      %1525 = vmatpush.msra.mxu0 %v1417
      %1526 = vmatpush.msra.mxu0 %v1416
      %1527 = vmatpush.msra.mxu0 %v1415
      %1528 = vmatpush.msra.mxu0 %v1414
      %1529 = vmatpush.msra.mxu0 %v1413
      %1530 = vmatmul.f32.gmra.mxu0 %v1458
      %v1531 = vpop.f32.mrf.mxu0
      %v1532 = vadd.f32 %v1491, %v1531
      %1533 = vmatmul.f32.gmra.mxu0 %v1460
      %v1534 = vpop.f32.mrf.mxu0
      %v1535 = vadd.f32 %v1494, %v1534
      %1536 = vmatmul.f32.gmra.mxu0 %v1462
      %v1537 = vpop.f32.mrf.mxu0
      %v1538 = vadd.f32 %v1497, %v1537
      %1539 = vmatmul.f32.gmra.mxu0 %v1464
      %v1540 = vpop.f32.mrf.mxu0
      %v1541 = vadd.f32 %v1500, %v1540
      %1542 = vmatmul.f32.gmra.mxu0 %v1466
      %v1543 = vpop.f32.mrf.mxu0
      %v1544 = vadd.f32 %v1503, %v1543
      %1545 = vmatmul.f32.gmra.mxu0 %v1468
      %v1546 = vpop.f32.mrf.mxu0
      %v1547 = vadd.f32 %v1506, %v1546
      %1548 = vmatmul.f32.gmra.mxu0 %v1470
      %v1549 = vpop.f32.mrf.mxu0
      %v1550 = vadd.f32 %v1509, %v1549
      %1551 = vmatmul.f32.gmra.mxu0 %v1472
      %v1552 = vpop.f32.mrf.mxu0
      %v1553 = vadd.f32 %v1512, %v1552
      %1554 = vdwg.mxu0
      %v1555 = vld [vmem:[%s7] sm:$0xff]
      %v1556 = vld [vmem:[%s7 + $0x8] sm:$0xff]
      %v1557 = vld [vmem:[%s7 + $0x10] sm:$0xff]
      %v1558 = vld [vmem:[%s7 + $0x18] sm:$0xff]
      %v1559 = vld [vmem:[%s8] sm:$0xff]
      %v1560 = vld [vmem:[%s8 + $0x8] sm:$0xff]
      %v1561 = vld [vmem:[%s8 + $0x10] sm:$0xff]
      %v1562 = vld [vmem:[%s8 + $0x18] sm:$0xff]
      %v1564 = vsel %vm445, %v1532, 0
      %v1567 = vsel %vm445, %v1535, 0
      %v1570 = vsel %vm445, %v1538, 0
      %v1573 = vsel %vm445, %v1541, 0
      %v1576 = vsel %vm445, %v1544, 0
      %v1579 = vsel %vm445, %v1547, 0
      %v1582 = vsel %vm445, %v1550, 0
      %v1585 = vsel %vm445, %v1553, 0
      %1587 = vmatpush.msra.mxu0 0.0
      %1588 = vmatpush.msra.mxu0 0.0
      %1589 = vmatpush.msra.mxu0 0.0
      %1590 = vmatpush.msra.mxu0 0.0
      %1591 = vmatpush.msra.mxu0 0.0
      %1592 = vmatpush.msra.mxu0 0.0
      %1593 = vmatpush.msra.mxu0 0.0
      %1594 = vmatpush.msra.mxu0 0.0
      %1595 = vmatpush.msra.mxu0 0.0
      %1596 = vmatpush.msra.mxu0 0.0
      %1597 = vmatpush.msra.mxu0 0.0
      %1598 = vmatpush.msra.mxu0 0.0
      %1599 = vmatpush.msra.mxu0 %v1562
      %1600 = vmatpush.msra.mxu0 %v1561
      %1601 = vmatpush.msra.mxu0 %v1560
      %1602 = vmatpush.msra.mxu0 %v1559
      %1603 = vmatmul.f32.gmra.mxu0 %v1564
      %v1604 = vpop.f32.mrf.mxu0
      %v1605 = vadd.f32 0.0, %v1604
      %1606 = vmatmul.f32.gmra.mxu0 %v1567
      %v1607 = vpop.f32.mrf.mxu0
      %v1608 = vadd.f32 0.0, %v1607
      %1609 = vmatmul.f32.gmra.mxu0 %v1570
      %v1610 = vpop.f32.mrf.mxu0
      %v1611 = vadd.f32 0.0, %v1610
      %1612 = vmatmul.f32.gmra.mxu0 %v1573
      %v1613 = vpop.f32.mrf.mxu0
      %v1614 = vadd.f32 0.0, %v1613
      %1615 = vmatmul.f32.gmra.mxu0 %v1576
      %v1616 = vpop.f32.mrf.mxu0
      %v1617 = vadd.f32 0.0, %v1616
      %1618 = vmatmul.f32.gmra.mxu0 %v1579
      %v1619 = vpop.f32.mrf.mxu0
      %v1620 = vadd.f32 0.0, %v1619
      %1621 = vmatmul.f32.gmra.mxu0 %v1582
      %v1622 = vpop.f32.mrf.mxu0
      %v1623 = vadd.f32 0.0, %v1622
      %1624 = vmatmul.f32.gmra.mxu0 %v1585
      %v1625 = vpop.f32.mrf.mxu0
      %v1626 = vadd.f32 0.0, %v1625
      %1627 = vdwg.mxu0
      %1628 = vmatpush.msra.mxu0 0.0
      %1629 = vmatpush.msra.mxu0 0.0
      %1630 = vmatpush.msra.mxu0 0.0
      %1631 = vmatpush.msra.mxu0 0.0
      %1632 = vmatpush.msra.mxu0 0.0
      %1633 = vmatpush.msra.mxu0 0.0
      %1634 = vmatpush.msra.mxu0 0.0
      %1635 = vmatpush.msra.mxu0 0.0
      %1636 = vmatpush.msra.mxu0 0.0
      %1637 = vmatpush.msra.mxu0 0.0
      %1638 = vmatpush.msra.mxu0 0.0
      %1639 = vmatpush.msra.mxu0 0.0
      %1640 = vmatpush.msra.mxu0 %v1558
      %1641 = vmatpush.msra.mxu0 %v1557
      %1642 = vmatpush.msra.mxu0 %v1556
      %1643 = vmatpush.msra.mxu0 %v1555
      %1644 = vmatmul.f32.gmra.mxu0 %v447
      %v1645 = vpop.f32.mrf.mxu0
      %v1646 = vadd.f32 %v1605, %v1645
      %1647 = vmatmul.f32.gmra.mxu0 %v450
      %v1648 = vpop.f32.mrf.mxu0
      %v1649 = vadd.f32 %v1608, %v1648
      %1650 = vmatmul.f32.gmra.mxu0 %v453
      %v1651 = vpop.f32.mrf.mxu0
      %v1652 = vadd.f32 %v1611, %v1651
      %1653 = vmatmul.f32.gmra.mxu0 %v456
      %v1654 = vpop.f32.mrf.mxu0
      %v1655 = vadd.f32 %v1614, %v1654
      %1656 = vmatmul.f32.gmra.mxu0 %v459
      %v1657 = vpop.f32.mrf.mxu0
      %v1658 = vadd.f32 %v1617, %v1657
      %1659 = vmatmul.f32.gmra.mxu0 %v462
      %v1660 = vpop.f32.mrf.mxu0
      %v1661 = vadd.f32 %v1620, %v1660
      %1662 = vmatmul.f32.gmra.mxu0 %v465
      %v1663 = vpop.f32.mrf.mxu0
      %v1664 = vadd.f32 %v1623, %v1663
      %1665 = vmatmul.f32.gmra.mxu0 %v468
      %v1666 = vpop.f32.mrf.mxu0
      %v1667 = vadd.f32 %v1626, %v1666
      %1668 = vdwg.mxu0
      %v1669 = vld [vmem:[%s9] sm:$0x1]
      %v1671 = vperm.slane %v1669, 0
      %v1673 = vadd.f32 %v1646, %v1671
      %v1674 = vadd.f32 %v1649, %v1671
      %v1675 = vadd.f32 %v1652, %v1671
      %v1676 = vadd.f32 %v1655, %v1671
      %v1677 = vadd.f32 %v1658, %v1671
      %v1678 = vadd.f32 %v1661, %v1671
      %v1679 = vadd.f32 %v1664, %v1671
      %v1680 = vadd.f32 %v1667, %v1671
      %v1681 = vmax.f32 %v1673, 0.0
      %v1682 = vmax.f32 %v1674, 0.0
      %v1683 = vmax.f32 %v1675, 0.0
      %v1684 = vmax.f32 %v1676, 0.0
      %v1685 = vmax.f32 %v1677, 0.0
      %v1686 = vmax.f32 %v1678, 0.0
      %v1687 = vmax.f32 %v1679, 0.0
      %v1688 = vmax.f32 %v1680, 0.0
      %1689 = vst.msk [vmem:[#allocation2] sm:$0xff] %vm445, %v1681
      %1690 = vst.msk [vmem:[#allocation2 + $0x8] sm:$0xff] %vm445, %v1682
      %1691 = vst.msk [vmem:[#allocation2 + $0x10] sm:$0xff] %vm445, %v1683
      %1692 = vst.msk [vmem:[#allocation2 + $0x18] sm:$0xff] %vm445, %v1684
      %1693 = vst.msk [vmem:[#allocation2 + $0x20] sm:$0xff] %vm445, %v1685
      %1694 = vst.msk [vmem:[#allocation2 + $0x28] sm:$0xff] %vm445, %v1686
      %1695 = vst.msk [vmem:[#allocation2 + $0x30] sm:$0xff] %vm445, %v1687
      %1696 = vst.msk [vmem:[#allocation2 + $0x38] sm:$0xff] %vm445, %v1688
      // Predicated region
      $region65: #{tpu_custom_call.1} parent=59 // pred_check
        %p1697 = pneg %p412
      $region66: #{tpu_custom_call.1} parent=59 // pred_check_branch
        %1699 = sbr.rel (%p1697) target = $region68
      $region67: #{tpu_custom_call.1} parent=59 // pred_region
        %1700 = vst.msk [vmem:[%s406] sm:$0xff] %vm445, %v1397
        %1701 = vst.msk [vmem:[%s406 + $0x8] sm:$0xff] %vm445, %v1398
        %1702 = vst.msk [vmem:[%s406 + $0x10] sm:$0xff] %vm445, %v1399
        %1703 = vst.msk [vmem:[%s406 + $0x18] sm:$0xff] %vm445, %v1400
        %1704 = vst.msk [vmem:[%s406 + $0x20] sm:$0xff] %vm445, %v1401
        %1705 = vst.msk [vmem:[%s406 + $0x28] sm:$0xff] %vm445, %v1402
        %1706 = vst.msk [vmem:[%s406 + $0x30] sm:$0xff] %vm445, %v1403
        %1707 = vst.msk [vmem:[%s406 + $0x38] sm:$0xff] %vm445, %v1404
        %1708 = vst.msk [vmem:[%s406 + $0x40] sm:$0xff] %vm445, %v1405
        %1709 = vst.msk [vmem:[%s406 + $0x48] sm:$0xff] %vm445, %v1406
        %1710 = vst.msk [vmem:[%s406 + $0x50] sm:$0xff] %vm445, %v1407
        %1711 = vst.msk [vmem:[%s406 + $0x58] sm:$0xff] %vm445, %v1408
        %1712 = vst.msk [vmem:[%s406 + $0x60] sm:$0xff] %vm445, %v1409
        %1713 = vst.msk [vmem:[%s406 + $0x68] sm:$0xff] %vm445, %v1410
        %1714 = vst.msk [vmem:[%s406 + $0x70] sm:$0xff] %vm445, %v1411
        %1715 = vst.msk [vmem:[%s406 + $0x78] sm:$0xff] %vm445, %v1412
        %1716 = vst.msk [vmem:[%s406 + $0x80] sm:$0xff] %vm445, %v1413
        %1717 = vst.msk [vmem:[%s406 + $0x88] sm:$0xff] %vm445, %v1414
        %1718 = vst.msk [vmem:[%s406 + $0x90] sm:$0xff] %vm445, %v1415
        %1719 = vst.msk [vmem:[%s406 + $0x98] sm:$0xff] %vm445, %v1416
        %1720 = vst.msk [vmem:[%s406 + $0xa0] sm:$0xff] %vm445, %v1417
        %1721 = vst.msk [vmem:[%s406 + $0xa8] sm:$0xff] %vm445, %v1418
        %1722 = vst.msk [vmem:[%s406 + $0xb0] sm:$0xff] %vm445, %v1419
        %1723 = vst.msk [vmem:[%s406 + $0xb8] sm:$0xff] %vm445, %v1420
        %1724 = vst.msk [vmem:[%s406 + $0xc0] sm:$0xff] %vm445, %v1421
        %1725 = vst.msk [vmem:[%s406 + $0xc8] sm:$0xff] %vm445, %v1422
        %1726 = vst.msk [vmem:[%s406 + $0xd0] sm:$0xff] %vm445, %v1423
        %1727 = vst.msk [vmem:[%s406 + $0xd8] sm:$0xff] %vm445, %v1424
        %1728 = vst.msk [vmem:[%s406 + $0xe0] sm:$0xff] %vm445, %v1425
        %1729 = vst.msk [vmem:[%s406 + $0xe8] sm:$0xff] %vm445, %v1426
        %1730 = vst.msk [vmem:[%s406 + $0xf0] sm:$0xff] %vm445, %v1427
        %1731 = vst.msk [vmem:[%s406 + $0xf8] sm:$0xff] %vm445, %v1428
        %1732 = vst.msk [vmem:[%s411] sm:$0xff] %vm445, %v1681
        %1733 = vst.msk [vmem:[%s411 + $0x8] sm:$0xff] %vm445, %v1682
        %1734 = vst.msk [vmem:[%s411 + $0x10] sm:$0xff] %vm445, %v1683
        %1735 = vst.msk [vmem:[%s411 + $0x18] sm:$0xff] %vm445, %v1684
        %1736 = vst.msk [vmem:[%s411 + $0x20] sm:$0xff] %vm445, %v1685
        %1737 = vst.msk [vmem:[%s411 + $0x28] sm:$0xff] %vm445, %v1686
        %1738 = vst.msk [vmem:[%s411 + $0x30] sm:$0xff] %vm445, %v1687
        %1739 = vst.msk [vmem:[%s411 + $0x38] sm:$0xff] %vm445, %v1688
      $region68: #{tpu_custom_call.1} parent=59 // pred_fallthru
        _
      %p1740 = scmp.lt.s32.totalorder %s27, 1
      %s1741 = scalar_select %p1740, %s27, 1
      %s1742 = smul.addr %s1741, 32
      %s1743 = smul.addr %s1742, 8
      %s1744 = scalar_lea.vmem %s10, %s1743
      %p1745 = scmp.lt.s32.totalorder %s27, 1
      %s1746 = scalar_select %p1745, %s27, 1
      %s1747 = smul.addr %s1746, 8
      %s1748 = smul.addr %s1747, 8
      %s1749 = scalar_lea.vmem %s11, %s1748
      // Predicated region
      $region69: #{tpu_custom_call.1} parent=59 // pred_check
        %p1750 = pneg %p268
      $region70: #{tpu_custom_call.1} parent=59 // pred_check_branch
        %1752 = sbr.rel (%p1750) target = $region72
      $region71: #{tpu_custom_call.1} parent=59 // pred_region
        _
      $region72: #{tpu_custom_call.1} parent=59 // pred_fallthru
        _
      // Predicated region
      $region73: #{tpu_custom_call.1} parent=59 // pred_check
        %p1753 = pneg %p294
      $region74: #{tpu_custom_call.1} parent=59 // pred_check_branch
        %1755 = sbr.rel (%p1753) target = $region76
      $region75: #{tpu_custom_call.1} parent=59 // pred_region
        _
      $region76: #{tpu_custom_call.1} parent=59 // pred_fallthru
        _
    $region60: #{tpu_custom_call.1} parent=5 // pred_fallthru
      _
    %p1756 = scmp.le.s32.totalorder 2, %s18
    // Predicated region
    $region77: #{tpu_custom_call.1} parent=5 // pred_check
      %p1757 = pneg %p1756
    $region78: #{tpu_custom_call.1} parent=5 // pred_check_branch
      %1759 = sbr.rel (%p1757) target = $region80
    $region79: #{tpu_custom_call.1} parent=5 // pred_region
      %s1760 = ssub.s32 %s18, 2
      // Predicated region
      $region81: #{tpu_custom_call.1} parent=79 // pred_check
        %p1761 = pneg %p274
      $region82: #{tpu_custom_call.1} parent=79 // pred_check_branch
        %1763 = sbr.rel (%p1761) target = $region84
      $region83: #{tpu_custom_call.1} parent=79 // pred_region
        %p1764 = scmp.lt.s32.totalorder %s29, 1
        %s1765 = scalar_select %p1764, %s29, 1
        %s1766 = smul.addr %s1765, 32
        %s1767 = smul.addr %s1766, 8
        %s1768 = scalar_lea.vmem %s10, %s1767
      $region84: #{tpu_custom_call.1} parent=79 // pred_fallthru
        _
      // Predicated region
      $region85: #{tpu_custom_call.1} parent=79 // pred_check
        %p1769 = pneg %p300
      $region86: #{tpu_custom_call.1} parent=79 // pred_check_branch
        %1771 = sbr.rel (%p1769) target = $region88
      $region87: #{tpu_custom_call.1} parent=79 // pred_region
        %p1772 = scmp.lt.s32.totalorder %s29, 1
        %s1773 = scalar_select %p1772, %s29, 1
        %s1774 = smul.addr %s1773, 8
        %s1775 = smul.addr %s1774, 8
        %s1776 = scalar_lea.vmem %s11, %s1775
      $region88: #{tpu_custom_call.1} parent=79 // pred_fallthru
        _
    $region80: #{tpu_custom_call.1} parent=5 // pred_fallthru
      _
  $region6: #{tpu_custom_call.1} parent=0 // loop_footer
    %s22 = sadd.s32 1, %s18
  $region7: #{tpu_custom_call.1} parent=0 // loop_footer_branch
    %17 = sbr.rel target = $region3
  $region8: #{tpu_custom_call.1} parent=0 // loop_exit
    _

</llo_original>
